<compile_context>
chip_gen: v5e
topology: v5e:2x2
jax: 0.10.0
libtpu: 0.0.40
codegen_flags: <defaults>
</compile_context>

<pallas_src>
import functools

import numpy as np
import jax
import jax.numpy as jnp
from jax.experimental import pallas as pl
from jax.experimental.pallas import tpu as pltpu


# -----------------------------------------------------------------------------
# Deterministic parameter construction (mirrors the PyTorch __init__).
# -----------------------------------------------------------------------------
def _norm_pdf(x, loc, scale):
    return np.exp(-0.5 * ((x - loc) / scale) ** 2) / (scale * np.sqrt(2.0 * np.pi))


def feature_weights(K, kernel_min, kernel_max, bandwidth):
    """FeatureConnections weight (K, K): W[o, i] = shifted ring kernel o at i."""
    rows = []
    X = np.linspace(0.0, 1.0, K)
    for i in range(K):
        w = _norm_pdf(X, X[K // 2], bandwidth)
        w = (w - w.min()) / (w.max() - w.min())
        w = w * (kernel_max - kernel_min) + kernel_min
        w = np.roll(w, K // 2 + i)
        rows.append(w)
    return np.stack(rows).astype(np.float32)  # (K_out, K_in)


def spatial_kernel(near_sum, near_size, far_sum, far_size):
    """SpatialConnections per-channel (F, F) opponent-surround kernel."""
    sk = np.zeros((far_size, far_size), dtype=np.float32)
    inhibition = -far_sum / (far_size**2 - near_size**2)
    excitation = +near_sum / near_size**2
    u = far_size // 2 - near_size // 2
    v = far_size // 2 + near_size // 2 + 1
    sk[:] = inhibition
    sk[u:v, u:v] = excitation
    return sk


def build_spatial_matrix(sk, H, W):
    """M[out_pixel, in_pixel] so that (depthwise conv, zero pad) == M @ x_flat."""
    F = sk.shape[0]
    p = (F - 1) // 2  # padding used by the module
    M = np.zeros((H, W, H, W), dtype=np.float32)
    oh, ow = np.meshgrid(np.arange(H), np.arange(W), indexing="ij")
    for a in range(F):
        for b in range(F):
            ih = oh + a - p
            iw = ow + b - p
            valid = (ih >= 0) & (ih < H) & (iw >= 0) & (iw < W)
            M[oh[valid], ow[valid], ih[valid], iw[valid]] = sk[a, b]
    return M.reshape(H * W, H * W)


# -----------------------------------------------------------------------------
# Pallas kernel: one grid step == `time_chunk` forward-Euler iterations.
# -----------------------------------------------------------------------------
def _ring_kernel(drive_ref, wfb_ref, mt_ref, out_ref, x_ref, *, decay, gain,
                 precision):
    # x_ref: persistent VMEM state (N*K, H*W); zeroed at the first grid step only.
    @pl.when(pl.program_id(0) == 0)
    def _():
        x_ref[...] = jnp.zeros_like(x_ref)

    n_b, tc, k, hw = out_ref.shape          # (N, time_chunk, K, HW) output block
    X = x_ref[...]                          # carried state (NK, HW) f32 (4 vregs)

    # Statically unrolled inner time loop.  Large operands (notably the
    # (HW,HW) pixel-mixing matrix) are loaded at their point of use so their
    # live ranges stay short -- do NOT hoist them above the loop.
    for tl in range(tc):
        Xc = X.astype(mt_ref.dtype)         # bf16 matmul operand (f32 no-op if f32)
        # FeatureConnections: 1x1 ring conv == block-diag channel-mixing matmul.
        Yf = jnp.dot(wfb_ref[...], Xc, preferred_element_type=jnp.float32,
                     precision=precision)
        # SpatialConnections: depthwise opponent-surround conv == pixel-mixing matmul.
        Ys = jnp.dot(Xc, mt_ref[...], preferred_element_type=jnp.float32,
                     precision=precision)
        # S = 0.5*inbound + feature(X) + spatial(X) + biases (folded into drive).
        S = drive_ref[...] + Yf + Ys
        # Forward Euler: X <- (1 - h k^2 / r) X + (h / r) ReLU(S)
        X = decay * X + gain * jnp.maximum(S, 0.0)
        # keeptime: one tile-aligned store per step, directly in (N, T, K, HW) layout.
        out_ref[:, tl:tl + 1, :, :] = X.astype(out_ref.dtype).reshape(n_b, 1, k, hw)

    x_ref[...] = X


def ring_network_lattice(inbound, Wf, MT, bias_sum, *, num_iters, step_size,
                         time_constant, decay_constant, time_chunk=None,
                         matmul_dtype=jnp.bfloat16, out_dtype=jnp.float32):
    """inbound: (N, K, H, W) f32 -> (N, T, K, H, W) out_dtype (keeptime=True).

    Wf: (K, K) ring (feature) weights; MT: (HW, HW) with x_flat @ MT == depthwise
    spatial conv; bias_sum: (K,) summed conv biases (bias_f + bias_s).
    matmul_dtype=bf16 runs both matmuls at DEFAULT precision (single MXU pass,
    f32 accumulation); pass jnp.float32 to get 3-pass HIGH precision instead.
    """
    N, K, H, W = inbound.shape
    HW = H * W
    NK = N * K

    if time_chunk is None:
        time_chunk = max(1, min(16, num_iters))
    num_chunks = pl.cdiv(num_iters, time_chunk)
    # A ragged tail chunk just computes a few extra steps whose keeptime rows
    # fall out of bounds and are dropped at writeback (state is dead after).

    decay = float(1.0 - step_size * decay_constant**2 / time_constant)
    gain = float(step_size / time_constant)

    # Fold the loop-invariant drive once: 0.5*inbound + (bias_f + bias_s).
    inb2 = jnp.asarray(inbound, jnp.float32).reshape(NK, HW)
    bias_nk = jnp.tile(jnp.asarray(bias_sum, jnp.float32).reshape(K, 1), (N, 1))
    drive = 0.5 * inb2 + bias_nk                                   # (NK, HW) f32

    # Block-diagonal ring weights over the batch (small: (N*K, N*K)) and the
    # pixel-mixing operator, both cast once to the matmul operand dtype.
    matmul_dtype = jnp.dtype(matmul_dtype)
    Wfb = jnp.kron(jnp.eye(N, dtype=jnp.float32), jnp.asarray(Wf, jnp.float32))
    Wfb = Wfb.astype(matmul_dtype)                                 # (NK, NK)
    MTc = jnp.asarray(MT, jnp.float32).astype(matmul_dtype)        # (HW, HW)
    precision = (None if matmul_dtype == jnp.dtype(jnp.bfloat16)
                 else jax.lax.Precision.HIGH)

    kernel = functools.partial(_ring_kernel, decay=decay, gain=gain,
                               precision=precision)

    out = pl.pallas_call(
        kernel,
        out_shape=jax.ShapeDtypeStruct((N, num_iters, K, HW), out_dtype),
        grid_spec=pltpu.PrefetchScalarGridSpec(
            num_scalar_prefetch=0,
            grid=(num_chunks,),
            in_specs=[
                pl.BlockSpec((NK, HW), lambda c: (0, 0)),   # folded drive (f32)
                pl.BlockSpec((NK, NK), lambda c: (0, 0)),   # block-diag ring weights
                pl.BlockSpec((HW, HW), lambda c: (0, 0)),   # pixel-mixing matrix^T
            ],
            out_specs=pl.BlockSpec((N, time_chunk, K, HW), lambda c: (0, c, 0, 0)),
            scratch_shapes=[pltpu.VMEM((NK, HW), jnp.float32)],    # persistent state X
        ),
        compiler_params=pltpu.CompilerParams(
            dimension_semantics=("arbitrary",),   # serial time axis (state carry)
        ),
    )(drive, Wfb, MTc)

    # (N, T, K, HW) -> (N, T, K, H, W): trailing-dim split only (no transpose).
    return out.reshape(N, num_iters, K, H, W)


# -----------------------------------------------------------------------------
# Pure-JAX reference (mirrors the PyTorch forward exactly) for validation.
# -----------------------------------------------------------------------------
def reference_forward(inbound, Wf, sk, bias_f, bias_s, *, num_iters,
                      step_size, time_constant, decay_constant):
    N, K, H, W = inbound.shape
    F = sk.shape[0]
    pad = (F - 1) // 2
    w_spat = jnp.zeros((K, K, F, F), jnp.float32)
    w_spat = w_spat.at[jnp.arange(K), jnp.arange(K)].set(jnp.asarray(sk))
    h, r, kd = step_size, time_constant, decay_constant
    HI = jax.lax.Precision.HIGHEST

    X = jnp.zeros_like(inbound)
    history = []
    for _ in range(num_iters):
        S = 0.5 * inbound
        S = S + jnp.einsum("oi,nihw->nohw", jnp.asarray(Wf), X, precision=HI)
        S = S + bias_f[None, :, None, None]
        S = S + jax.lax.conv_general_dilated(
            X, w_spat, window_strides=(1, 1), padding=[(pad, pad), (pad, pad)],
            dimension_numbers=("NCHW", "OIHW", "NCHW"), precision=HI)
        S = S + bias_s[None, :, None, None]
        X = (1.0 - h * kd**2 / r) * X + (h / r) * jax.nn.relu(S)
        history.append(X)
    return jnp.stack(history, axis=1)  # (N, T, K, H, W)


# -----------------------------------------------------------------------------
if __name__ == "__main__":
    # Circuit hyper-parameters (CircuitParameters defaults).
    time_constant = 5.0
    decay_constant = 1.0
    near_size, far_size = 9, 29
    near_strength, far_strength = 0.4, 0.4
    ring_bandwidth, ring_min, ring_max = 0.5, -0.5, 0.1

    # Small but representative shapes.
    N, K, H, W = 2, 8, 16, 16
    num_iters, step_size = 8, 1.0

    # Deterministic parameters.
    Wf = feature_weights(K, ring_min, ring_max, ring_bandwidth)            # (K, K)
    sk = spatial_kernel(near_strength, near_size, far_strength, far_size)  # (F, F)
    MT = build_spatial_matrix(sk, H, W).T                                  # (HW, HW): x @ MT == conv
    # Conv2d biases (nn.Conv2d default has bias=True) -> deterministic small values.
    bias_f = (0.01 * np.cos(np.arange(K))).astype(np.float32)
    bias_s = (0.01 * np.sin(np.arange(K))).astype(np.float32)
    bias_sum = bias_f + bias_s                                             # (K,)

    # Deterministic input.
    key = jax.random.PRNGKey(0)
    inbound = jax.random.normal(key, (N, K, H, W), dtype=jnp.float32)

    # time_chunk=4 -> 2 grid steps: exercises the chunked pipeline and the
    # state carry across grid iterations.
    out = ring_network_lattice(
        inbound, jnp.asarray(Wf), jnp.asarray(MT), jnp.asarray(bias_sum),
        num_iters=num_iters, step_size=step_size,
        time_constant=time_constant, decay_constant=decay_constant,
        time_chunk=4)
    out = jax.block_until_ready(out)
    assert out.shape == (N, num_iters, K, H, W) and out.dtype == jnp.float32

    ref = reference_forward(
        inbound, Wf, sk, jnp.asarray(bias_f), jnp.asarray(bias_s),
        num_iters=num_iters, step_size=step_size,
        time_constant=time_constant, decay_constant=decay_constant)
    ref = jax.block_until_ready(ref)

    np.testing.assert_allclose(np.asarray(out), np.asarray(ref), rtol=1e-2, atol=1e-2)
    print("KERNEL_OK")
</pallas_src>

<mosaic_0001>
module attributes {stable_mosaic.version = 11 : i64} {
  func.func @_ring_kernel(%arg0: i32, %arg1: memref<16x256xf32, #tpu.memory_space<vmem>>, %arg2: memref<16x16xbf16, #tpu.memory_space<vmem>>, %arg3: memref<256x256xbf16, #tpu.memory_space<vmem>>, %arg4: memref<2x4x8x256xf32, #tpu.memory_space<vmem>>, %arg5: memref<16x256xf32, #tpu.memory_space<vmem>>) attributes {dimension_semantics = [#tpu.dimension_semantics<arbitrary>], iteration_bounds = array<i64: 2>, scalar_prefetch = 0 : i64, scratch_operands = 1 : i64, tpu.core_type = #tpu.core_type<tc>, window_params = [{pipeline_mode = #tpu.pipeline_mode<synchronous>, transform_indices = @transform_0, window_bounds = array<i64: 16, 256>}, {pipeline_mode = #tpu.pipeline_mode<synchronous>, transform_indices = @transform_1, window_bounds = array<i64: 16, 16>}, {pipeline_mode = #tpu.pipeline_mode<synchronous>, transform_indices = @transform_2, window_bounds = array<i64: 256, 256>}, {transform_indices = @transform_3, window_bounds = array<i64: 2, 4, 8, 256>}]} {
    %c0_i32 = arith.constant 0 : i32
    %0 = arith.cmpi eq, %arg0, %c0_i32 : i32
    %1 = arith.extui %0 : i1 to i32
    %c0_i32_0 = arith.constant 0 : i32
    %2 = arith.cmpi ne, %1, %c0_i32_0 : i32
    scf.if %2 {
      %cst_60 = arith.constant 0.000000e+00 : f32
      %73 = vector.broadcast %cst_60 : f32 to vector<16x256xf32>
      %c0_61 = arith.constant 0 : index
      %c0_62 = arith.constant 0 : index
      %74 = vector.load %arg5[%c0_61, %c0_62] : memref<16x256xf32, #tpu.memory_space<vmem>>, vector<16x256xf32>
      tpu.vector_store %arg5[%c0_61, %c0_62], %73 {strides = array<i32>} : memref<16x256xf32, #tpu.memory_space<vmem>>, vector<16x256xf32>,
    } else {
    }
    %c0 = arith.constant 0 : index
    %c0_1 = arith.constant 0 : index
    %3 = vector.load %arg5[%c0, %c0_1] : memref<16x256xf32, #tpu.memory_space<vmem>>, vector<16x256xf32>
    %4 = arith.truncf %3 : vector<16x256xf32> to vector<16x256xbf16>
    %c0_2 = arith.constant 0 : index
    %c0_3 = arith.constant 0 : index
    %5 = vector.load %arg2[%c0_2, %c0_3] : memref<16x16xbf16, #tpu.memory_space<vmem>>, vector<16x16xbf16>
    %cst = arith.constant dense<0.000000e+00> : vector<16x256xf32>
    %6 = tpu.matmul %5, %4, %cst {dimension_numbers = #tpu.dot_dimension_numbers<[1], [0], [0], [1], [0, 0, 1, 1], [], []>} : vector<16x16xbf16>, vector<16x256xbf16>, vector<16x256xf32> -> vector<16x256xf32>
    %c0_4 = arith.constant 0 : index
    %c0_5 = arith.constant 0 : index
    %7 = vector.load %arg3[%c0_4, %c0_5] : memref<256x256xbf16, #tpu.memory_space<vmem>>, vector<256x256xbf16>
    %cst_6 = arith.constant dense<0.000000e+00> : vector<16x256xf32>
    %8 = tpu.matmul %4, %7, %cst_6 {dimension_numbers = #tpu.dot_dimension_numbers<[1], [0], [0], [1], [0, 0, 1, 1], [], []>} : vector<16x256xbf16>, vector<256x256xbf16>, vector<16x256xf32> -> vector<16x256xf32>
    %c0_7 = arith.constant 0 : index
    %c0_8 = arith.constant 0 : index
    %9 = vector.load %arg1[%c0_7, %c0_8] : memref<16x256xf32, #tpu.memory_space<vmem>>, vector<16x256xf32>
    %10 = arith.addf %9, %6 : vector<16x256xf32>
    %11 = arith.addf %10, %8 : vector<16x256xf32>
    %cst_9 = arith.constant 8.000000e-01 : f32
    %12 = vector.broadcast %cst_9 : f32 to vector<16x256xf32>
    %13 = arith.mulf %12, %3 : vector<16x256xf32>
    %cst_10 = arith.constant 0.000000e+00 : f32
    %14 = vector.broadcast %cst_10 : f32 to vector<16x256xf32>
    %15 = arith.maximumf %11, %14 : vector<16x256xf32>
    %cst_11 = arith.constant 2.000000e-01 : f32
    %16 = vector.broadcast %cst_11 : f32 to vector<16x256xf32>
    %17 = arith.mulf %16, %15 : vector<16x256xf32>
    %18 = arith.addf %13, %17 : vector<16x256xf32>
    %19 = vector.shape_cast %18 : vector<16x256xf32> to vector<2x1x8x256xf32>
    %c0_12 = arith.constant 0 : index
    %c0_13 = arith.constant 0 : index
    %c0_14 = arith.constant 0 : index
    %c0_15 = arith.constant 0 : index
    %20 = vector.load %arg4[%c0_12, %c0_13, %c0_14, %c0_15] : memref<2x4x8x256xf32, #tpu.memory_space<vmem>>, vector<2x1x8x256xf32>
    tpu.vector_store %arg4[%c0_12, %c0_13, %c0_14, %c0_15], %19 {strides = array<i32>} : memref<2x4x8x256xf32, #tpu.memory_space<vmem>>, vector<2x1x8x256xf32>,
    %21 = arith.truncf %18 : vector<16x256xf32> to vector<16x256xbf16>
    %c0_16 = arith.constant 0 : index
    %c0_17 = arith.constant 0 : index
    %22 = vector.load %arg2[%c0_16, %c0_17] : memref<16x16xbf16, #tpu.memory_space<vmem>>, vector<16x16xbf16>
    %cst_18 = arith.constant dense<0.000000e+00> : vector<16x256xf32>
    %23 = tpu.matmul %22, %21, %cst_18 {dimension_numbers = #tpu.dot_dimension_numbers<[1], [0], [0], [1], [0, 0, 1, 1], [], []>} : vector<16x16xbf16>, vector<16x256xbf16>, vector<16x256xf32> -> vector<16x256xf32>
    %c0_19 = arith.constant 0 : index
    %c0_20 = arith.constant 0 : index
    %24 = vector.load %arg3[%c0_19, %c0_20] : memref<256x256xbf16, #tpu.memory_space<vmem>>, vector<256x256xbf16>
    %cst_21 = arith.constant dense<0.000000e+00> : vector<16x256xf32>
    %25 = tpu.matmul %21, %24, %cst_21 {dimension_numbers = #tpu.dot_dimension_numbers<[1], [0], [0], [1], [0, 0, 1, 1], [], []>} : vector<16x256xbf16>, vector<256x256xbf16>, vector<16x256xf32> -> vector<16x256xf32>
    %c0_22 = arith.constant 0 : index
    %c0_23 = arith.constant 0 : index
    %26 = vector.load %arg1[%c0_22, %c0_23] : memref<16x256xf32, #tpu.memory_space<vmem>>, vector<16x256xf32>
    %27 = arith.addf %26, %23 : vector<16x256xf32>
    %28 = arith.addf %27, %25 : vector<16x256xf32>
    %cst_24 = arith.constant 8.000000e-01 : f32
    %29 = vector.broadcast %cst_24 : f32 to vector<16x256xf32>
    %30 = arith.mulf %29, %18 : vector<16x256xf32>
    %cst_25 = arith.constant 0.000000e+00 : f32
    %31 = vector.broadcast %cst_25 : f32 to vector<16x256xf32>
    %32 = arith.maximumf %28, %31 : vector<16x256xf32>
    %cst_26 = arith.constant 2.000000e-01 : f32
    %33 = vector.broadcast %cst_26 : f32 to vector<16x256xf32>
    %34 = arith.mulf %33, %32 : vector<16x256xf32>
    %35 = arith.addf %30, %34 : vector<16x256xf32>
    %36 = vector.shape_cast %35 : vector<16x256xf32> to vector<2x1x8x256xf32>
    %c0_27 = arith.constant 0 : index
    %c1 = arith.constant 1 : index
    %c0_28 = arith.constant 0 : index
    %c0_29 = arith.constant 0 : index
    %37 = vector.load %arg4[%c0_27, %c1, %c0_28, %c0_29] : memref<2x4x8x256xf32, #tpu.memory_space<vmem>>, vector<2x1x8x256xf32>
    tpu.vector_store %arg4[%c0_27, %c1, %c0_28, %c0_29], %36 {strides = array<i32>} : memref<2x4x8x256xf32, #tpu.memory_space<vmem>>, vector<2x1x8x256xf32>,
    %38 = arith.truncf %35 : vector<16x256xf32> to vector<16x256xbf16>
    %c0_30 = arith.constant 0 : index
    %c0_31 = arith.constant 0 : index
    %39 = vector.load %arg2[%c0_30, %c0_31] : memref<16x16xbf16, #tpu.memory_space<vmem>>, vector<16x16xbf16>
    %cst_32 = arith.constant dense<0.000000e+00> : vector<16x256xf32>
    %40 = tpu.matmul %39, %38, %cst_32 {dimension_numbers = #tpu.dot_dimension_numbers<[1], [0], [0], [1], [0, 0, 1, 1], [], []>} : vector<16x16xbf16>, vector<16x256xbf16>, vector<16x256xf32> -> vector<16x256xf32>
    %c0_33 = arith.constant 0 : index
    %c0_34 = arith.constant 0 : index
    %41 = vector.load %arg3[%c0_33, %c0_34] : memref<256x256xbf16, #tpu.memory_space<vmem>>, vector<256x256xbf16>
    %cst_35 = arith.constant dense<0.000000e+00> : vector<16x256xf32>
    %42 = tpu.matmul %38, %41, %cst_35 {dimension_numbers = #tpu.dot_dimension_numbers<[1], [0], [0], [1], [0, 0, 1, 1], [], []>} : vector<16x256xbf16>, vector<256x256xbf16>, vector<16x256xf32> -> vector<16x256xf32>
    %c0_36 = arith.constant 0 : index
    %c0_37 = arith.constant 0 : index
    %43 = vector.load %arg1[%c0_36, %c0_37] : memref<16x256xf32, #tpu.memory_space<vmem>>, vector<16x256xf32>
    %44 = arith.addf %43, %40 : vector<16x256xf32>
    %45 = arith.addf %44, %42 : vector<16x256xf32>
    %cst_38 = arith.constant 8.000000e-01 : f32
    %46 = vector.broadcast %cst_38 : f32 to vector<16x256xf32>
    %47 = arith.mulf %46, %35 : vector<16x256xf32>
    %cst_39 = arith.constant 0.000000e+00 : f32
    %48 = vector.broadcast %cst_39 : f32 to vector<16x256xf32>
    %49 = arith.maximumf %45, %48 : vector<16x256xf32>
    %cst_40 = arith.constant 2.000000e-01 : f32
    %50 = vector.broadcast %cst_40 : f32 to vector<16x256xf32>
    %51 = arith.mulf %50, %49 : vector<16x256xf32>
    %52 = arith.addf %47, %51 : vector<16x256xf32>
    %53 = vector.shape_cast %52 : vector<16x256xf32> to vector<2x1x8x256xf32>
    %c0_41 = arith.constant 0 : index
    %c2 = arith.constant 2 : index
    %c0_42 = arith.constant 0 : index
    %c0_43 = arith.constant 0 : index
    %54 = vector.load %arg4[%c0_41, %c2, %c0_42, %c0_43] : memref<2x4x8x256xf32, #tpu.memory_space<vmem>>, vector<2x1x8x256xf32>
    tpu.vector_store %arg4[%c0_41, %c2, %c0_42, %c0_43], %53 {strides = array<i32>} : memref<2x4x8x256xf32, #tpu.memory_space<vmem>>, vector<2x1x8x256xf32>,
    %55 = arith.truncf %52 : vector<16x256xf32> to vector<16x256xbf16>
    %c0_44 = arith.constant 0 : index
    %c0_45 = arith.constant 0 : index
    %56 = vector.load %arg2[%c0_44, %c0_45] : memref<16x16xbf16, #tpu.memory_space<vmem>>, vector<16x16xbf16>
    %cst_46 = arith.constant dense<0.000000e+00> : vector<16x256xf32>
    %57 = tpu.matmul %56, %55, %cst_46 {dimension_numbers = #tpu.dot_dimension_numbers<[1], [0], [0], [1], [0, 0, 1, 1], [], []>} : vector<16x16xbf16>, vector<16x256xbf16>, vector<16x256xf32> -> vector<16x256xf32>
    %c0_47 = arith.constant 0 : index
    %c0_48 = arith.constant 0 : index
    %58 = vector.load %arg3[%c0_47, %c0_48] : memref<256x256xbf16, #tpu.memory_space<vmem>>, vector<256x256xbf16>
    %cst_49 = arith.constant dense<0.000000e+00> : vector<16x256xf32>
    %59 = tpu.matmul %55, %58, %cst_49 {dimension_numbers = #tpu.dot_dimension_numbers<[1], [0], [0], [1], [0, 0, 1, 1], [], []>} : vector<16x256xbf16>, vector<256x256xbf16>, vector<16x256xf32> -> vector<16x256xf32>
    %c0_50 = arith.constant 0 : index
    %c0_51 = arith.constant 0 : index
    %60 = vector.load %arg1[%c0_50, %c0_51] : memref<16x256xf32, #tpu.memory_space<vmem>>, vector<16x256xf32>
    %61 = arith.addf %60, %57 : vector<16x256xf32>
    %62 = arith.addf %61, %59 : vector<16x256xf32>
    %cst_52 = arith.constant 8.000000e-01 : f32
    %63 = vector.broadcast %cst_52 : f32 to vector<16x256xf32>
    %64 = arith.mulf %63, %52 : vector<16x256xf32>
    %cst_53 = arith.constant 0.000000e+00 : f32
    %65 = vector.broadcast %cst_53 : f32 to vector<16x256xf32>
    %66 = arith.maximumf %62, %65 : vector<16x256xf32>
    %cst_54 = arith.constant 2.000000e-01 : f32
    %67 = vector.broadcast %cst_54 : f32 to vector<16x256xf32>
    %68 = arith.mulf %67, %66 : vector<16x256xf32>
    %69 = arith.addf %64, %68 : vector<16x256xf32>
    %70 = vector.shape_cast %69 : vector<16x256xf32> to vector<2x1x8x256xf32>
    %c0_55 = arith.constant 0 : index
    %c3 = arith.constant 3 : index
    %c0_56 = arith.constant 0 : index
    %c0_57 = arith.constant 0 : index
    %71 = vector.load %arg4[%c0_55, %c3, %c0_56, %c0_57] : memref<2x4x8x256xf32, #tpu.memory_space<vmem>>, vector<2x1x8x256xf32>
    tpu.vector_store %arg4[%c0_55, %c3, %c0_56, %c0_57], %70 {strides = array<i32>} : memref<2x4x8x256xf32, #tpu.memory_space<vmem>>, vector<2x1x8x256xf32>,
    %c0_58 = arith.constant 0 : index
    %c0_59 = arith.constant 0 : index
    %72 = vector.load %arg5[%c0_58, %c0_59] : memref<16x256xf32, #tpu.memory_space<vmem>>, vector<16x256xf32>
    tpu.vector_store %arg5[%c0_58, %c0_59], %69 {strides = array<i32>} : memref<16x256xf32, #tpu.memory_space<vmem>>, vector<16x256xf32>,
    return
  }
  func.func @transform_0(%arg0: i32) -> (i32, i32) {
    %c0_i32 = arith.constant 0 : i32
    %c0_i32_0 = arith.constant 0 : i32
    %c0_i32_1 = arith.constant 0 : i32
    return %c0_i32, %c0_i32_0 : i32, i32
  }
  func.func @transform_1(%arg0: i32) -> (i32, i32) {
    %c0_i32 = arith.constant 0 : i32
    %c0_i32_0 = arith.constant 0 : i32
    %c0_i32_1 = arith.constant 0 : i32
    return %c0_i32, %c0_i32_0 : i32, i32
  }
  func.func @transform_2(%arg0: i32) -> (i32, i32) {
    %c0_i32 = arith.constant 0 : i32
    %c0_i32_0 = arith.constant 0 : i32
    %c0_i32_1 = arith.constant 0 : i32
    return %c0_i32, %c0_i32_0 : i32, i32
  }
  func.func @transform_3(%arg0: i32) -> (i32, i32, i32, i32) {
    %c0_i32 = arith.constant 0 : i32
    %c0_i32_0 = arith.constant 0 : i32
    %c0_i32_1 = arith.constant 0 : i32
    %c0_i32_2 = arith.constant 0 : i32
    return %c0_i32, %arg0, %c0_i32_0, %c0_i32_1 : i32, i32, i32, i32
  }
}

</mosaic_0001>

<llo_original>
// kernel: tpu_custom_call.1
$region0: #{tpu_custom_call.1}
  #allocation0 [shape = 'u32[]', space=smem, size = 0x4, offset = 0x4, fixed_abs, tag = 'smem constant byte address 0x4 - core index']
  #allocation1 [shape = 'u32[72,128]{1,0:T(1,128)}', space=vmem, size = 0x9000, scoped, tag = 'internal scratch']
  #allocation2 [shape = 'f32[16,256]{1,0:T(8,128)}', space=vmem, size = 0x4000, scoped, tag = 'scratch operand']
  #allocation10 [shape = 's32[]', space=sflag, size = 0x4, offset = 0, fixed_abs, tag = 'sflag constant byte address 0x0 - dummy sync flag']
  %s0 = inlined_call_operand.hbm [shape: f32[16,256], index: 0, kind: input, shape index: {}]
  %s1 = inlined_call_operand.hbm [shape: bf16[16,16], index: 1, kind: input, shape index: {}]
  %s2 = inlined_call_operand.hbm [shape: bf16[256,256], index: 2, kind: input, shape index: {}]
  %s3 = inlined_call_operand.hbm [shape: f32[2,8,8,256], index: 3, kind: output, shape index: {}]
  %s4 = sld [smem:[#allocation0]]
  $region61: #{tpu_custom_call.1} parent=0
    _
  %s6 = ssub.s32 1, %s4
  %s7 = scalar_select 0, %s6, %s4
  $region1: #{tpu_custom_call.1} parent=0
    #allocation3 [shape = 'u8[16384]{0}', space=vmem, size = 0x4000, scoped, tag = 'input window, operand 0, single buffered']
    #allocation4 [shape = 's32[2]{0}', space=sflag, size = 0x8, scoped, tag = 'scoped memory for tpu_custom_call.1']
    #allocation5 [shape = 's32[2]{0}', space=sflag, size = 0x8, scoped, tag = 'scoped memory for tpu_custom_call.1']
    #allocation6 [shape = 'u8[4096]{0}', space=vmem, size = 0x1000, scoped, tag = 'input window, operand 1, single buffered']
    #allocation7 [shape = 's32[1]{0}', space=sflag, size = 0x4, scoped, tag = 'scoped memory for tpu_custom_call.1']
    #allocation8 [shape = 'u8[131072]{0}', space=vmem, size = 0x20000, scoped, tag = 'input window, operand 2, single buffered']
    #allocation9 [shape = 'u8[131072]{0}', space=vmem, size = 0x20000, scoped, tag = 'output window, operand 0']
    %8 = vsyncpa [#allocation4], 0
    %9 = vsyncpa [#allocation7], 0
    %10 = vsyncpa [#allocation5], 0
    %s11 = scalar_lea.sflag [#allocation5], 1
    %12 = vsyncpa %s11, 0
    loop: start=0, step=1, limit=4
    $region2: #{tpu_custom_call.1} parent=1 // loop_pre_header
      _
    $region3: #{tpu_custom_call.1} parent=1 // loop_header
      %s14 = sphi 0, %s18
      %p15 = scmp.ge.s32.totalorder %s14, 4
      %s22 = sphi 0, %s22
      %s24 = sphi 0, %s22
      %s25 = sphi 0, %s24
      %s39 = sphi 0, %s25
      %s43 = sphi 0, %s43
      %s45 = sphi 0, %s43
      %s46 = sphi 0, %s45
      %s60 = sphi 0, %s46
      %s64 = sphi 0, %s64
      %s66 = sphi 0, %s64
      %s67 = sphi 0, %s66
      %s81 = sphi 0, %s67
      %s87 = sphi 0, %s89
      %s90 = sphi 0, %s87
      %s91 = sphi 0, %s90
      %s107 = sphi 0, %s91
    $region4: #{tpu_custom_call.1} parent=1 // loop_header_branch
      %17 = sbr.rel (%p15) target = $region8
    $region5: #{tpu_custom_call.1} parent=1 // loop_body
      %s19 = ssub.s32 %s14, 1
      %s20 = ssub.s32 %s14, 2
      %s21 = sadd.s32 %s14, 1
      %s23 = sadd.s32 %s22, 1
      %p26 = scmp.eq.s32.totalorder %s14, 1
      %p27 = scmp.ne.s32.totalorder %s22, %s24
      %p28 = scmp.eq.s32.totalorder %s14, 0
      %p29 = por %p27, %p28
      %p30 = scmp.ne.s32.totalorder %s22, %s24
      %p31 = scmp.eq.s32.totalorder %s19, 1
      %p32 = por %p30, %p31
      %p33 = scmp.ne.s32.totalorder %s24, %s25
      %p34 = scmp.eq.s32.totalorder %s19, 0
      %p35 = por %p33, %p34
      %p36 = scmp.ne.s32.totalorder %s24, %s25
      %p37 = scmp.eq.s32.totalorder %s20, 1
      %p38 = por %p36, %p37
      %p40 = scmp.ne.s32.totalorder %s25, %s39
      %p41 = scmp.eq.s32.totalorder %s20, 0
      %p42 = por %p40, %p41
      %s44 = sadd.s32 %s43, 1
      %p47 = scmp.eq.s32.totalorder %s14, 1
      %p48 = scmp.ne.s32.totalorder %s43, %s45
      %p49 = scmp.eq.s32.totalorder %s14, 0
      %p50 = por %p48, %p49
      %p51 = scmp.ne.s32.totalorder %s43, %s45
      %p52 = scmp.eq.s32.totalorder %s19, 1
      %p53 = por %p51, %p52
      %p54 = scmp.ne.s32.totalorder %s45, %s46
      %p55 = scmp.eq.s32.totalorder %s19, 0
      %p56 = por %p54, %p55
      %p57 = scmp.ne.s32.totalorder %s45, %s46
      %p58 = scmp.eq.s32.totalorder %s20, 1
      %p59 = por %p57, %p58
      %p61 = scmp.ne.s32.totalorder %s46, %s60
      %p62 = scmp.eq.s32.totalorder %s20, 0
      %p63 = por %p61, %p62
      %s65 = sadd.s32 %s64, 1
      %p68 = scmp.eq.s32.totalorder %s14, 1
      %p69 = scmp.ne.s32.totalorder %s64, %s66
      %p70 = scmp.eq.s32.totalorder %s14, 0
      %p71 = por %p69, %p70
      %p72 = scmp.ne.s32.totalorder %s64, %s66
      %p73 = scmp.eq.s32.totalorder %s19, 1
      %p74 = por %p72, %p73
      %p75 = scmp.ne.s32.totalorder %s66, %s67
      %p76 = scmp.eq.s32.totalorder %s19, 0
      %p77 = por %p75, %p76
      %p78 = scmp.ne.s32.totalorder %s66, %s67
      %p79 = scmp.eq.s32.totalorder %s20, 1
      %p80 = por %p78, %p79
      %p82 = scmp.ne.s32.totalorder %s67, %s81
      %p83 = scmp.eq.s32.totalorder %s20, 0
      %p84 = por %p82, %p83
      %s85 = ssub.s32 %s14, %s21
      %p86 = scmp.eq.s32.totalorder %s85, 0
      %s88 = sadd.s32 %s87, 1
      %s89 = scalar_select %p86, %s87, %s88
      %p92 = pneg %p86
      %p93 = scmp.eq.s32.totalorder %s14, 1
      %p94 = por %p92, %p93
      %p95 = scmp.ne.s32.totalorder %s87, %s90
      %p96 = scmp.eq.s32.totalorder %s14, 0
      %p97 = por %p95, %p96
      %p98 = scmp.ne.s32.totalorder %s87, %s90
      %p99 = scmp.eq.s32.totalorder %s19, 1
      %p100 = por %p98, %p99
      %p101 = scmp.ne.s32.totalorder %s90, %s91
      %p102 = scmp.eq.s32.totalorder %s19, 0
      %p103 = por %p101, %p102
      %p104 = scmp.ne.s32.totalorder %s90, %s91
      %p105 = scmp.eq.s32.totalorder %s20, 1
      %p106 = por %p104, %p105
      %p108 = scmp.ne.s32.totalorder %s91, %s107
      %p109 = scmp.eq.s32.totalorder %s20, 0
      %p110 = por %p108, %p109
      %p111 = scmp.le.s32.totalorder 1, %s14
      %p112 = scmp.lt.s32.totalorder %s14, 3
      %p113 = pnand %p111, %p112
      %p114 = pneg %p113
      // Predicated region
      $region9: #{tpu_custom_call.1} parent=5 // pred_check
        _
      $region10: #{tpu_custom_call.1} parent=5 // pred_check_branch
        %116 = sbr.rel (%p113) target = $region12
      $region11: #{tpu_custom_call.1} parent=5 // pred_region
        %s117 = ssub.s32 %s14, 1
        // Predicated region
        $region13: #{tpu_custom_call.1} parent=11 // pred_check
          %p118 = pneg %p35
        $region14: #{tpu_custom_call.1} parent=11 // pred_check_branch
          %120 = sbr.rel (%p118) target = $region16
        $region15: #{tpu_custom_call.1} parent=11 // pred_region
          %122 = vsyncadd [#allocation4], 0
          %s123 = sshll.u32 %s0, 4
          %s124 = int_to_ptr.hbm [resolvable:$true] %s123
          %s125 = sshll.u32 [#allocation3], 4
          %s126 = int_to_ptr.vmem [resolvable:$true] %s125
          %131 = dma.hbm_to_vmem [thread:$0]  %s124, 512, %s126, [#allocation4], 256, 256, 16
        $region16: #{tpu_custom_call.1} parent=11 // pred_fallthru
          _
        // Predicated region
        $region17: #{tpu_custom_call.1} parent=11 // pred_check
          %p132 = pneg %p56
        $region18: #{tpu_custom_call.1} parent=11 // pred_check_branch
          %134 = sbr.rel (%p132) target = $region20
        $region19: #{tpu_custom_call.1} parent=11 // pred_region
          %136 = vsyncadd [#allocation7], 0
          %s137 = sshll.u32 %s1, 4
          %s138 = int_to_ptr.hbm [resolvable:$true] %s137
          %s139 = sshll.u32 [#allocation6], 4
          %s140 = int_to_ptr.vmem [resolvable:$true] %s139
          %145 = dma.hbm_to_vmem [thread:$0]  %s138, 128, %s140, [#allocation7], 64, 64, 4
        $region20: #{tpu_custom_call.1} parent=11 // pred_fallthru
          _
        // Predicated region
        $region21: #{tpu_custom_call.1} parent=11 // pred_check
          %p146 = pneg %p77
        $region22: #{tpu_custom_call.1} parent=11 // pred_check_branch
          %148 = sbr.rel (%p146) target = $region24
        $region23: #{tpu_custom_call.1} parent=11 // pred_region
          %150 = vsyncadd [#allocation7], 0
          %s151 = sshll.u32 %s2, 4
          %s152 = int_to_ptr.hbm [resolvable:$true] %s151
          %s153 = sshll.u32 [#allocation8], 4
          %s154 = int_to_ptr.vmem [resolvable:$true] %s153
          %159 = dma.hbm_to_vmem [thread:$0]  %s152, 4096, %s154, [#allocation7], 128, 128, 8
        $region24: #{tpu_custom_call.1} parent=11 // pred_fallthru
          _
      $region12: #{tpu_custom_call.1} parent=5 // pred_fallthru
        _
      %p160 = scmp.lt.s32.totalorder %s14, 2
      // Predicated region
      $region25: #{tpu_custom_call.1} parent=5 // pred_check
        %p161 = pneg %p160
      $region26: #{tpu_custom_call.1} parent=5 // pred_check_branch
        %163 = sbr.rel (%p161) target = $region28
      $region27: #{tpu_custom_call.1} parent=5 // pred_region
        _
      $region28: #{tpu_custom_call.1} parent=5 // pred_fallthru
        _
      %p164 = scmp.le.s32.totalorder 1, %s14
      %p165 = scmp.lt.s32.totalorder %s14, 3
      %p166 = pnand %p164, %p165
      %p167 = pneg %p166
      // Predicated region
      $region29: #{tpu_custom_call.1} parent=5 // pred_check
        _
      $region30: #{tpu_custom_call.1} parent=5 // pred_check_branch
        %169 = sbr.rel (%p166) target = $region32
      $region31: #{tpu_custom_call.1} parent=5 // pred_region
        %s170 = ssub.s32 %s14, 1
        // Predicated region
        $region33: #{tpu_custom_call.1} parent=31 // pred_check
          %p171 = pneg %p35
        $region34: #{tpu_custom_call.1} parent=31 // pred_check_branch
          %173 = sbr.rel (%p171) target = $region36
        $region35: #{tpu_custom_call.1} parent=31 // pred_region
          %175 = dma.done [#allocation4], 512
        $region36: #{tpu_custom_call.1} parent=31 // pred_fallthru
          _
        // Predicated region
        $region37: #{tpu_custom_call.1} parent=31 // pred_check
          %p176 = pneg %p56
        $region38: #{tpu_custom_call.1} parent=31 // pred_check_branch
          %178 = sbr.rel (%p176) target = $region40
        $region39: #{tpu_custom_call.1} parent=31 // pred_region
          %180 = dma.done [#allocation7], 128
        $region40: #{tpu_custom_call.1} parent=31 // pred_fallthru
          _
        // Predicated region
        $region41: #{tpu_custom_call.1} parent=31 // pred_check
          %p181 = pneg %p77
        $region42: #{tpu_custom_call.1} parent=31 // pred_check_branch
          %183 = sbr.rel (%p181) target = $region44
        $region43: #{tpu_custom_call.1} parent=31 // pred_region
          %185 = dma.done [#allocation7], 4096
        $region44: #{tpu_custom_call.1} parent=31 // pred_fallthru
          _
        %p186 = pneg %p35
        %p187 = pneg %p32
        %p188 = pneg %p56
        %p189 = pneg %p53
        %p190 = pneg %p77
        %p191 = pneg %p74
        %p192 = pneg %p103
        %p193 = pneg %p100
        %s194 = sand.u32 %s90, 1
        %s195 = scalar_lea.sflag [#allocation5], %s194
        %s196 = sand.u32 %s90, 1
        %s197 = smul.addr %s196, 128
        %s198 = scalar_lea.vmem [#allocation9], %s197
        %s199 = smul.u32 4, %s19
        %p201 = scmp.eq.s32.totalorder %s19, 0
        // Predicated region
        $region45: #{tpu_custom_call.1} parent=31 // pred_check
          %p202 = pneg %p201
        $region46: #{tpu_custom_call.1} parent=31 // pred_check_branch
          %204 = sbr.rel (%p202) target = $region48
        $region47: #{tpu_custom_call.1} parent=31 // pred_region
          %205 = vst [vmem:[#allocation2] sm:$0xff] 0.0
          %206 = vst [vmem:[#allocation2 + $0x8] sm:$0xff] 0.0
          %207 = vst [vmem:[#allocation2 + $0x10] sm:$0xff] 0.0
          %208 = vst [vmem:[#allocation2 + $0x18] sm:$0xff] 0.0
        $region48: #{tpu_custom_call.1} parent=31 // pred_fallthru
          _
        %v209 = vld [vmem:[#allocation2] sm:$0xff]
        %v210 = vld [vmem:[#allocation2 + $0x8] sm:$0xff]
        %v211 = vld [vmem:[#allocation2 + $0x10] sm:$0xff]
        %v212 = vld [vmem:[#allocation2 + $0x18] sm:$0xff]
        %v213 = vpack.c.bf16 %v211, %v209
        %v214 = vpack.c.bf16 %v212, %v210
        %v215 = vld [vmem:[#allocation6] sm:$0xf]
        %v216 = vld [vmem:[#allocation6 + $0x4] sm:$0xf]
        %v219 = vunpack.c.l.b16 %v215
        %v220 = vunpack.c.l.b16 %v216
        %v221 = vpack.c.b16 %v220, %v219
        %vm222 = vcmask 130048
        %v224 = vsel %vm222, %v221, 0
        %226 = vmatpush.bf16.msra.mxu0 0
        %227 = vmatpush.bf16.msra.mxu0 0
        %228 = vmatpush.bf16.msra.mxu0 0
        %229 = vmatpush.bf16.msra.mxu0 0
        %230 = vmatpush.bf16.msra.mxu0 0
        %231 = vmatpush.bf16.msra.mxu0 0
        %232 = vmatpush.bf16.msra.mxu0 0
        %233 = vmatpush.bf16.msra.mxu0 %v213
        %234 = vmatmul.bf16.gmra.mxu0 %v224
        %v235 = vpop.f32.mrf.mxu0
        %v236 = vadd.f32 0.0, %v235
        %v237 = vpop.f32.mrf.mxu0
        %v238 = vadd.f32 0.0, %v237
        %239 = vdwg.mxu0
        %240 = vmatpush.bf16.msra.mxu0 0
        %241 = vmatpush.bf16.msra.mxu0 0
        %242 = vmatpush.bf16.msra.mxu0 0
        %243 = vmatpush.bf16.msra.mxu0 0
        %244 = vmatpush.bf16.msra.mxu0 0
        %245 = vmatpush.bf16.msra.mxu0 0
        %246 = vmatpush.bf16.msra.mxu0 0
        %247 = vmatpush.bf16.msra.mxu0 %v214
        %248 = vmatmul.bf16.gmra.mxu0 %v224
        %v249 = vpop.f32.mrf.mxu0
        %v250 = vadd.f32 0.0, %v249
        %v251 = vpop.f32.mrf.mxu0
        %v252 = vadd.f32 0.0, %v251
        %253 = vdwg.mxu0
        %v254 = vld [vmem:[#allocation8] sm:$0xff]
        %v255 = vld [vmem:[#allocation8 + $0x8] sm:$0xff]
        %v256 = vld [vmem:[#allocation8 + $0x10] sm:$0xff]
        %v257 = vld [vmem:[#allocation8 + $0x18] sm:$0xff]
        %v258 = vld [vmem:[#allocation8 + $0x20] sm:$0xff]
        %v259 = vld [vmem:[#allocation8 + $0x28] sm:$0xff]
        %v260 = vld [vmem:[#allocation8 + $0x30] sm:$0xff]
        %v261 = vld [vmem:[#allocation8 + $0x38] sm:$0xff]
        %v262 = vld [vmem:[#allocation8 + $0x40] sm:$0xff]
        %v263 = vld [vmem:[#allocation8 + $0x48] sm:$0xff]
        %v264 = vld [vmem:[#allocation8 + $0x50] sm:$0xff]
        %v265 = vld [vmem:[#allocation8 + $0x58] sm:$0xff]
        %v266 = vld [vmem:[#allocation8 + $0x60] sm:$0xff]
        %v267 = vld [vmem:[#allocation8 + $0x68] sm:$0xff]
        %v268 = vld [vmem:[#allocation8 + $0x70] sm:$0xff]
        %v269 = vld [vmem:[#allocation8 + $0x78] sm:$0xff]
        %v270 = vld [vmem:[#allocation8 + $0x80] sm:$0xff]
        %v271 = vld [vmem:[#allocation8 + $0x88] sm:$0xff]
        %v272 = vld [vmem:[#allocation8 + $0x90] sm:$0xff]
        %v273 = vld [vmem:[#allocation8 + $0x98] sm:$0xff]
        %v274 = vld [vmem:[#allocation8 + $0xa0] sm:$0xff]
        %v275 = vld [vmem:[#allocation8 + $0xa8] sm:$0xff]
        %v276 = vld [vmem:[#allocation8 + $0xb0] sm:$0xff]
        %v277 = vld [vmem:[#allocation8 + $0xb8] sm:$0xff]
        %v278 = vld [vmem:[#allocation8 + $0xc0] sm:$0xff]
        %v279 = vld [vmem:[#allocation8 + $0xc8] sm:$0xff]
        %v280 = vld [vmem:[#allocation8 + $0xd0] sm:$0xff]
        %v281 = vld [vmem:[#allocation8 + $0xd8] sm:$0xff]
        %v282 = vld [vmem:[#allocation8 + $0xe0] sm:$0xff]
        %v283 = vld [vmem:[#allocation8 + $0xe8] sm:$0xff]
        %v284 = vld [vmem:[#allocation8 + $0xf0] sm:$0xff]
        %v285 = vld [vmem:[#allocation8 + $0xf8] sm:$0xff]
        %v318 = vunpack.c.l.b16 %v254
        %v319 = vunpack.c.h.b16 %v254
        %v320 = vunpack.c.l.b16 %v255
        %v321 = vunpack.c.h.b16 %v255
        %v322 = vunpack.c.l.b16 %v256
        %v323 = vunpack.c.h.b16 %v256
        %v324 = vunpack.c.l.b16 %v257
        %v325 = vunpack.c.h.b16 %v257
        %v326 = vunpack.c.l.b16 %v258
        %v327 = vunpack.c.h.b16 %v258
        %v328 = vunpack.c.l.b16 %v259
        %v329 = vunpack.c.h.b16 %v259
        %v330 = vunpack.c.l.b16 %v260
        %v331 = vunpack.c.h.b16 %v260
        %v332 = vunpack.c.l.b16 %v261
        %v333 = vunpack.c.h.b16 %v261
        %v334 = vunpack.c.l.b16 %v262
        %v335 = vunpack.c.h.b16 %v262
        %v336 = vunpack.c.l.b16 %v263
        %v337 = vunpack.c.h.b16 %v263
        %v338 = vunpack.c.l.b16 %v264
        %v339 = vunpack.c.h.b16 %v264
        %v340 = vunpack.c.l.b16 %v265
        %v341 = vunpack.c.h.b16 %v265
        %v342 = vunpack.c.l.b16 %v266
        %v343 = vunpack.c.h.b16 %v266
        %v344 = vunpack.c.l.b16 %v267
        %v345 = vunpack.c.h.b16 %v267
        %v346 = vunpack.c.l.b16 %v268
        %v347 = vunpack.c.h.b16 %v268
        %v348 = vunpack.c.l.b16 %v269
        %v349 = vunpack.c.h.b16 %v269
        %v350 = vunpack.c.l.b16 %v270
        %v351 = vunpack.c.h.b16 %v270
        %v352 = vunpack.c.l.b16 %v271
        %v353 = vunpack.c.h.b16 %v271
        %v354 = vunpack.c.l.b16 %v272
        %v355 = vunpack.c.h.b16 %v272
        %v356 = vunpack.c.l.b16 %v273
        %v357 = vunpack.c.h.b16 %v273
        %v358 = vunpack.c.l.b16 %v274
        %v359 = vunpack.c.h.b16 %v274
        %v360 = vunpack.c.l.b16 %v275
        %v361 = vunpack.c.h.b16 %v275
        %v362 = vunpack.c.l.b16 %v276
        %v363 = vunpack.c.h.b16 %v276
        %v364 = vunpack.c.l.b16 %v277
        %v365 = vunpack.c.h.b16 %v277
        %v366 = vunpack.c.l.b16 %v278
        %v367 = vunpack.c.h.b16 %v278
        %v368 = vunpack.c.l.b16 %v279
        %v369 = vunpack.c.h.b16 %v279
        %v370 = vunpack.c.l.b16 %v280
        %v371 = vunpack.c.h.b16 %v280
        %v372 = vunpack.c.l.b16 %v281
        %v373 = vunpack.c.h.b16 %v281
        %v374 = vunpack.c.l.b16 %v282
        %v375 = vunpack.c.h.b16 %v282
        %v376 = vunpack.c.l.b16 %v283
        %v377 = vunpack.c.h.b16 %v283
        %v378 = vunpack.c.l.b16 %v284
        %v379 = vunpack.c.h.b16 %v284
        %v380 = vunpack.c.l.b16 %v285
        %v381 = vunpack.c.h.b16 %v285
        %v382 = vpack.c.b16 %v320, %v318
        %v383 = vpack.c.b16 %v321, %v319
        %v384 = vpack.c.b16 %v324, %v322
        %v385 = vpack.c.b16 %v325, %v323
        %v386 = vpack.c.b16 %v328, %v326
        %v387 = vpack.c.b16 %v329, %v327
        %v388 = vpack.c.b16 %v332, %v330
        %v389 = vpack.c.b16 %v333, %v331
        %v390 = vpack.c.b16 %v336, %v334
        %v391 = vpack.c.b16 %v337, %v335
        %v392 = vpack.c.b16 %v340, %v338
        %v393 = vpack.c.b16 %v341, %v339
        %v394 = vpack.c.b16 %v344, %v342
        %v395 = vpack.c.b16 %v345, %v343
        %v396 = vpack.c.b16 %v348, %v346
        %v397 = vpack.c.b16 %v349, %v347
        %v398 = vpack.c.b16 %v352, %v350
        %v399 = vpack.c.b16 %v353, %v351
        %v400 = vpack.c.b16 %v356, %v354
        %v401 = vpack.c.b16 %v357, %v355
        %v402 = vpack.c.b16 %v360, %v358
        %v403 = vpack.c.b16 %v361, %v359
        %v404 = vpack.c.b16 %v364, %v362
        %v405 = vpack.c.b16 %v365, %v363
        %v406 = vpack.c.b16 %v368, %v366
        %v407 = vpack.c.b16 %v369, %v367
        %v408 = vpack.c.b16 %v372, %v370
        %v409 = vpack.c.b16 %v373, %v371
        %v410 = vpack.c.b16 %v376, %v374
        %v411 = vpack.c.b16 %v377, %v375
        %v412 = vpack.c.b16 %v380, %v378
        %v413 = vpack.c.b16 %v381, %v379
        %446 = vmatpush.bf16.msra.mxu0 %v396
        %447 = vmatpush.bf16.msra.mxu0 %v394
        %448 = vmatpush.bf16.msra.mxu0 %v392
        %449 = vmatpush.bf16.msra.mxu0 %v390
        %450 = vmatpush.bf16.msra.mxu0 %v388
        %451 = vmatpush.bf16.msra.mxu0 %v386
        %452 = vmatpush.bf16.msra.mxu0 %v384
        %453 = vmatpush.bf16.msra.mxu0 %v382
        %454 = vmatmul.bf16.gmra.mxu0 %v213
        %v455 = vpop.f32.mrf.mxu0
        %v456 = vadd.f32 0.0, %v455
        %v457 = vpop.f32.mrf.mxu0
        %v458 = vadd.f32 0.0, %v457
        %459 = vdwg.mxu0
        %460 = vmatpush.bf16.msra.mxu0 %v412
        %461 = vmatpush.bf16.msra.mxu0 %v410
        %462 = vmatpush.bf16.msra.mxu0 %v408
        %463 = vmatpush.bf16.msra.mxu0 %v406
        %464 = vmatpush.bf16.msra.mxu0 %v404
        %465 = vmatpush.bf16.msra.mxu0 %v402
        %466 = vmatpush.bf16.msra.mxu0 %v400
        %467 = vmatpush.bf16.msra.mxu0 %v398
        %468 = vmatmul.bf16.gmra.mxu0 %v214
        %v469 = vpop.f32.mrf.mxu0
        %v470 = vadd.f32 %v456, %v469
        %v471 = vpop.f32.mrf.mxu0
        %v472 = vadd.f32 %v458, %v471
        %473 = vdwg.mxu0
        %474 = vmatpush.bf16.msra.mxu0 %v397
        %475 = vmatpush.bf16.msra.mxu0 %v395
        %476 = vmatpush.bf16.msra.mxu0 %v393
        %477 = vmatpush.bf16.msra.mxu0 %v391
        %478 = vmatpush.bf16.msra.mxu0 %v389
        %479 = vmatpush.bf16.msra.mxu0 %v387
        %480 = vmatpush.bf16.msra.mxu0 %v385
        %481 = vmatpush.bf16.msra.mxu0 %v383
        %482 = vmatmul.bf16.gmra.mxu0 %v213
        %v483 = vpop.f32.mrf.mxu0
        %v484 = vadd.f32 0.0, %v483
        %v485 = vpop.f32.mrf.mxu0
        %v486 = vadd.f32 0.0, %v485
        %487 = vdwg.mxu0
        %488 = vmatpush.bf16.msra.mxu0 %v413
        %489 = vmatpush.bf16.msra.mxu0 %v411
        %490 = vmatpush.bf16.msra.mxu0 %v409
        %491 = vmatpush.bf16.msra.mxu0 %v407
        %492 = vmatpush.bf16.msra.mxu0 %v405
        %493 = vmatpush.bf16.msra.mxu0 %v403
        %494 = vmatpush.bf16.msra.mxu0 %v401
        %495 = vmatpush.bf16.msra.mxu0 %v399
        %496 = vmatmul.bf16.gmra.mxu0 %v214
        %v497 = vpop.f32.mrf.mxu0
        %v498 = vadd.f32 %v484, %v497
        %v499 = vpop.f32.mrf.mxu0
        %v500 = vadd.f32 %v486, %v499
        %501 = vdwg.mxu0
        %v502 = vld [vmem:[#allocation3] sm:$0xff]
        %v503 = vld [vmem:[#allocation3 + $0x8] sm:$0xff]
        %v504 = vld [vmem:[#allocation3 + $0x10] sm:$0xff]
        %v505 = vld [vmem:[#allocation3 + $0x18] sm:$0xff]
        %v506 = vadd.f32 %v502, %v236
        %v507 = vadd.f32 %v503, %v250
        %v508 = vadd.f32 %v504, %v238
        %v509 = vadd.f32 %v505, %v252
        %v510 = vadd.f32 %v506, %v470
        %v511 = vadd.f32 %v507, %v498
        %v512 = vadd.f32 %v508, %v472
        %v513 = vadd.f32 %v509, %v500
        %v514 = vmul.f32 %v209, 0.8
        %v515 = vmul.f32 %v210, 0.8
        %v516 = vmul.f32 %v211, 0.8
        %v517 = vmul.f32 %v212, 0.8
        %v518 = vmax.f32 %v510, 0.0
        %v519 = vmax.f32 %v511, 0.0
        %v520 = vmax.f32 %v512, 0.0
        %v521 = vmax.f32 %v513, 0.0
        %v522 = vmul.f32 %v518, 0.2
        %v523 = vmul.f32 %v519, 0.2
        %v524 = vmul.f32 %v520, 0.2
        %v525 = vmul.f32 %v521, 0.2
        %v526 = vadd.f32 %v514, %v522
        %v527 = vadd.f32 %v515, %v523
        %v528 = vadd.f32 %v516, %v524
        %v529 = vadd.f32 %v517, %v525
        %530 = vst [vmem:[%s198] sm:$0xff] %v526
        %531 = vst [vmem:[%s198 + $0x8] sm:$0xff] %v527
        %532 = vst [vmem:[%s198 + $0x40] sm:$0xff] %v528
        %533 = vst [vmem:[%s198 + $0x48] sm:$0xff] %v529
        %v534 = vpack.c.bf16 %v528, %v526
        %v535 = vpack.c.bf16 %v529, %v527
        %v536 = vld [vmem:[#allocation6] sm:$0xf]
        %v537 = vld [vmem:[#allocation6 + $0x4] sm:$0xf]
        %v540 = vunpack.c.l.b16 %v536
        %v541 = vunpack.c.l.b16 %v537
        %v542 = vpack.c.b16 %v541, %v540
        %v544 = vsel %vm222, %v542, 0
        %546 = vmatpush.bf16.msra.mxu0 0
        %547 = vmatpush.bf16.msra.mxu0 0
        %548 = vmatpush.bf16.msra.mxu0 0
        %549 = vmatpush.bf16.msra.mxu0 0
        %550 = vmatpush.bf16.msra.mxu0 0
        %551 = vmatpush.bf16.msra.mxu0 0
        %552 = vmatpush.bf16.msra.mxu0 0
        %553 = vmatpush.bf16.msra.mxu0 %v534
        %554 = vmatmul.bf16.gmra.mxu0 %v544
        %v555 = vpop.f32.mrf.mxu0
        %v556 = vadd.f32 0.0, %v555
        %v557 = vpop.f32.mrf.mxu0
        %v558 = vadd.f32 0.0, %v557
        %559 = vdwg.mxu0
        %560 = vmatpush.bf16.msra.mxu0 0
        %561 = vmatpush.bf16.msra.mxu0 0
        %562 = vmatpush.bf16.msra.mxu0 0
        %563 = vmatpush.bf16.msra.mxu0 0
        %564 = vmatpush.bf16.msra.mxu0 0
        %565 = vmatpush.bf16.msra.mxu0 0
        %566 = vmatpush.bf16.msra.mxu0 0
        %567 = vmatpush.bf16.msra.mxu0 %v535
        %568 = vmatmul.bf16.gmra.mxu0 %v544
        %v569 = vpop.f32.mrf.mxu0
        %v570 = vadd.f32 0.0, %v569
        %v571 = vpop.f32.mrf.mxu0
        %v572 = vadd.f32 0.0, %v571
        %573 = vdwg.mxu0
        %v574 = vld [vmem:[#allocation8] sm:$0xff]
        %v575 = vld [vmem:[#allocation8 + $0x8] sm:$0xff]
        %v576 = vld [vmem:[#allocation8 + $0x10] sm:$0xff]
        %v577 = vld [vmem:[#allocation8 + $0x18] sm:$0xff]
        %v578 = vld [vmem:[#allocation8 + $0x20] sm:$0xff]
        %v579 = vld [vmem:[#allocation8 + $0x28] sm:$0xff]
        %v580 = vld [vmem:[#allocation8 + $0x30] sm:$0xff]
        %v581 = vld [vmem:[#allocation8 + $0x38] sm:$0xff]
        %v582 = vld [vmem:[#allocation8 + $0x40] sm:$0xff]
        %v583 = vld [vmem:[#allocation8 + $0x48] sm:$0xff]
        %v584 = vld [vmem:[#allocation8 + $0x50] sm:$0xff]
        %v585 = vld [vmem:[#allocation8 + $0x58] sm:$0xff]
        %v586 = vld [vmem:[#allocation8 + $0x60] sm:$0xff]
        %v587 = vld [vmem:[#allocation8 + $0x68] sm:$0xff]
        %v588 = vld [vmem:[#allocation8 + $0x70] sm:$0xff]
        %v589 = vld [vmem:[#allocation8 + $0x78] sm:$0xff]
        %v590 = vld [vmem:[#allocation8 + $0x80] sm:$0xff]
        %v591 = vld [vmem:[#allocation8 + $0x88] sm:$0xff]
        %v592 = vld [vmem:[#allocation8 + $0x90] sm:$0xff]
        %v593 = vld [vmem:[#allocation8 + $0x98] sm:$0xff]
        %v594 = vld [vmem:[#allocation8 + $0xa0] sm:$0xff]
        %v595 = vld [vmem:[#allocation8 + $0xa8] sm:$0xff]
        %v596 = vld [vmem:[#allocation8 + $0xb0] sm:$0xff]
        %v597 = vld [vmem:[#allocation8 + $0xb8] sm:$0xff]
        %v598 = vld [vmem:[#allocation8 + $0xc0] sm:$0xff]
        %v599 = vld [vmem:[#allocation8 + $0xc8] sm:$0xff]
        %v600 = vld [vmem:[#allocation8 + $0xd0] sm:$0xff]
        %v601 = vld [vmem:[#allocation8 + $0xd8] sm:$0xff]
        %v602 = vld [vmem:[#allocation8 + $0xe0] sm:$0xff]
        %v603 = vld [vmem:[#allocation8 + $0xe8] sm:$0xff]
        %v604 = vld [vmem:[#allocation8 + $0xf0] sm:$0xff]
        %v605 = vld [vmem:[#allocation8 + $0xf8] sm:$0xff]
        %v638 = vunpack.c.l.b16 %v574
        %v639 = vunpack.c.h.b16 %v574
        %v640 = vunpack.c.l.b16 %v575
        %v641 = vunpack.c.h.b16 %v575
        %v642 = vunpack.c.l.b16 %v576
        %v643 = vunpack.c.h.b16 %v576
        %v644 = vunpack.c.l.b16 %v577
        %v645 = vunpack.c.h.b16 %v577
        %v646 = vunpack.c.l.b16 %v578
        %v647 = vunpack.c.h.b16 %v578
        %v648 = vunpack.c.l.b16 %v579
        %v649 = vunpack.c.h.b16 %v579
        %v650 = vunpack.c.l.b16 %v580
        %v651 = vunpack.c.h.b16 %v580
        %v652 = vunpack.c.l.b16 %v581
        %v653 = vunpack.c.h.b16 %v581
        %v654 = vunpack.c.l.b16 %v582
        %v655 = vunpack.c.h.b16 %v582
        %v656 = vunpack.c.l.b16 %v583
        %v657 = vunpack.c.h.b16 %v583
        %v658 = vunpack.c.l.b16 %v584
        %v659 = vunpack.c.h.b16 %v584
        %v660 = vunpack.c.l.b16 %v585
        %v661 = vunpack.c.h.b16 %v585
        %v662 = vunpack.c.l.b16 %v586
        %v663 = vunpack.c.h.b16 %v586
        %v664 = vunpack.c.l.b16 %v587
        %v665 = vunpack.c.h.b16 %v587
        %v666 = vunpack.c.l.b16 %v588
        %v667 = vunpack.c.h.b16 %v588
        %v668 = vunpack.c.l.b16 %v589
        %v669 = vunpack.c.h.b16 %v589
        %v670 = vunpack.c.l.b16 %v590
        %v671 = vunpack.c.h.b16 %v590
        %v672 = vunpack.c.l.b16 %v591
        %v673 = vunpack.c.h.b16 %v591
        %v674 = vunpack.c.l.b16 %v592
        %v675 = vunpack.c.h.b16 %v592
        %v676 = vunpack.c.l.b16 %v593
        %v677 = vunpack.c.h.b16 %v593
        %v678 = vunpack.c.l.b16 %v594
        %v679 = vunpack.c.h.b16 %v594
        %v680 = vunpack.c.l.b16 %v595
        %v681 = vunpack.c.h.b16 %v595
        %v682 = vunpack.c.l.b16 %v596
        %v683 = vunpack.c.h.b16 %v596
        %v684 = vunpack.c.l.b16 %v597
        %v685 = vunpack.c.h.b16 %v597
        %v686 = vunpack.c.l.b16 %v598
        %v687 = vunpack.c.h.b16 %v598
        %v688 = vunpack.c.l.b16 %v599
        %v689 = vunpack.c.h.b16 %v599
        %v690 = vunpack.c.l.b16 %v600
        %v691 = vunpack.c.h.b16 %v600
        %v692 = vunpack.c.l.b16 %v601
        %v693 = vunpack.c.h.b16 %v601
        %v694 = vunpack.c.l.b16 %v602
        %v695 = vunpack.c.h.b16 %v602
        %v696 = vunpack.c.l.b16 %v603
        %v697 = vunpack.c.h.b16 %v603
        %v698 = vunpack.c.l.b16 %v604
        %v699 = vunpack.c.h.b16 %v604
        %v700 = vunpack.c.l.b16 %v605
        %v701 = vunpack.c.h.b16 %v605
        %v702 = vpack.c.b16 %v640, %v638
        %v703 = vpack.c.b16 %v641, %v639
        %v704 = vpack.c.b16 %v644, %v642
        %v705 = vpack.c.b16 %v645, %v643
        %v706 = vpack.c.b16 %v648, %v646
        %v707 = vpack.c.b16 %v649, %v647
        %v708 = vpack.c.b16 %v652, %v650
        %v709 = vpack.c.b16 %v653, %v651
        %v710 = vpack.c.b16 %v656, %v654
        %v711 = vpack.c.b16 %v657, %v655
        %v712 = vpack.c.b16 %v660, %v658
        %v713 = vpack.c.b16 %v661, %v659
        %v714 = vpack.c.b16 %v664, %v662
        %v715 = vpack.c.b16 %v665, %v663
        %v716 = vpack.c.b16 %v668, %v666
        %v717 = vpack.c.b16 %v669, %v667
        %v718 = vpack.c.b16 %v672, %v670
        %v719 = vpack.c.b16 %v673, %v671
        %v720 = vpack.c.b16 %v676, %v674
        %v721 = vpack.c.b16 %v677, %v675
        %v722 = vpack.c.b16 %v680, %v678
        %v723 = vpack.c.b16 %v681, %v679
        %v724 = vpack.c.b16 %v684, %v682
        %v725 = vpack.c.b16 %v685, %v683
        %v726 = vpack.c.b16 %v688, %v686
        %v727 = vpack.c.b16 %v689, %v687
        %v728 = vpack.c.b16 %v692, %v690
        %v729 = vpack.c.b16 %v693, %v691
        %v730 = vpack.c.b16 %v696, %v694
        %v731 = vpack.c.b16 %v697, %v695
        %v732 = vpack.c.b16 %v700, %v698
        %v733 = vpack.c.b16 %v701, %v699
        %766 = vmatpush.bf16.msra.mxu0 %v716
        %767 = vmatpush.bf16.msra.mxu0 %v714
        %768 = vmatpush.bf16.msra.mxu0 %v712
        %769 = vmatpush.bf16.msra.mxu0 %v710
        %770 = vmatpush.bf16.msra.mxu0 %v708
        %771 = vmatpush.bf16.msra.mxu0 %v706
        %772 = vmatpush.bf16.msra.mxu0 %v704
        %773 = vmatpush.bf16.msra.mxu0 %v702
        %774 = vmatmul.bf16.gmra.mxu0 %v534
        %v775 = vpop.f32.mrf.mxu0
        %v776 = vadd.f32 0.0, %v775
        %v777 = vpop.f32.mrf.mxu0
        %v778 = vadd.f32 0.0, %v777
        %779 = vdwg.mxu0
        %780 = vmatpush.bf16.msra.mxu0 %v732
        %781 = vmatpush.bf16.msra.mxu0 %v730
        %782 = vmatpush.bf16.msra.mxu0 %v728
        %783 = vmatpush.bf16.msra.mxu0 %v726
        %784 = vmatpush.bf16.msra.mxu0 %v724
        %785 = vmatpush.bf16.msra.mxu0 %v722
        %786 = vmatpush.bf16.msra.mxu0 %v720
        %787 = vmatpush.bf16.msra.mxu0 %v718
        %788 = vmatmul.bf16.gmra.mxu0 %v535
        %v789 = vpop.f32.mrf.mxu0
        %v790 = vadd.f32 %v776, %v789
        %v791 = vpop.f32.mrf.mxu0
        %v792 = vadd.f32 %v778, %v791
        %793 = vdwg.mxu0
        %794 = vmatpush.bf16.msra.mxu0 %v717
        %795 = vmatpush.bf16.msra.mxu0 %v715
        %796 = vmatpush.bf16.msra.mxu0 %v713
        %797 = vmatpush.bf16.msra.mxu0 %v711
        %798 = vmatpush.bf16.msra.mxu0 %v709
        %799 = vmatpush.bf16.msra.mxu0 %v707
        %800 = vmatpush.bf16.msra.mxu0 %v705
        %801 = vmatpush.bf16.msra.mxu0 %v703
        %802 = vmatmul.bf16.gmra.mxu0 %v534
        %v803 = vpop.f32.mrf.mxu0
        %v804 = vadd.f32 0.0, %v803
        %v805 = vpop.f32.mrf.mxu0
        %v806 = vadd.f32 0.0, %v805
        %807 = vdwg.mxu0
        %808 = vmatpush.bf16.msra.mxu0 %v733
        %809 = vmatpush.bf16.msra.mxu0 %v731
        %810 = vmatpush.bf16.msra.mxu0 %v729
        %811 = vmatpush.bf16.msra.mxu0 %v727
        %812 = vmatpush.bf16.msra.mxu0 %v725
        %813 = vmatpush.bf16.msra.mxu0 %v723
        %814 = vmatpush.bf16.msra.mxu0 %v721
        %815 = vmatpush.bf16.msra.mxu0 %v719
        %816 = vmatmul.bf16.gmra.mxu0 %v535
        %v817 = vpop.f32.mrf.mxu0
        %v818 = vadd.f32 %v804, %v817
        %v819 = vpop.f32.mrf.mxu0
        %v820 = vadd.f32 %v806, %v819
        %821 = vdwg.mxu0
        %v822 = vld [vmem:[#allocation3] sm:$0xff]
        %v823 = vld [vmem:[#allocation3 + $0x8] sm:$0xff]
        %v824 = vld [vmem:[#allocation3 + $0x10] sm:$0xff]
        %v825 = vld [vmem:[#allocation3 + $0x18] sm:$0xff]
        %v826 = vadd.f32 %v822, %v556
        %v827 = vadd.f32 %v823, %v570
        %v828 = vadd.f32 %v824, %v558
        %v829 = vadd.f32 %v825, %v572
        %v830 = vadd.f32 %v826, %v790
        %v831 = vadd.f32 %v827, %v818
        %v832 = vadd.f32 %v828, %v792
        %v833 = vadd.f32 %v829, %v820
        %v834 = vmul.f32 %v526, 0.8
        %v835 = vmul.f32 %v527, 0.8
        %v836 = vmul.f32 %v528, 0.8
        %v837 = vmul.f32 %v529, 0.8
        %v838 = vmax.f32 %v830, 0.0
        %v839 = vmax.f32 %v831, 0.0
        %v840 = vmax.f32 %v832, 0.0
        %v841 = vmax.f32 %v833, 0.0
        %v842 = vmul.f32 %v838, 0.2
        %v843 = vmul.f32 %v839, 0.2
        %v844 = vmul.f32 %v840, 0.2
        %v845 = vmul.f32 %v841, 0.2
        %v846 = vadd.f32 %v834, %v842
        %v847 = vadd.f32 %v835, %v843
        %v848 = vadd.f32 %v836, %v844
        %v849 = vadd.f32 %v837, %v845
        %s850 = scalar_lea.vmem %s198, 16 [#allocation9]
        %851 = vst [vmem:[%s850] sm:$0xff] %v846
        %852 = vst [vmem:[%s850 + $0x8] sm:$0xff] %v847
        %853 = vst [vmem:[%s850 + $0x40] sm:$0xff] %v848
        %854 = vst [vmem:[%s850 + $0x48] sm:$0xff] %v849
        %v855 = vpack.c.bf16 %v848, %v846
        %v856 = vpack.c.bf16 %v849, %v847
        %v857 = vld [vmem:[#allocation6] sm:$0xf]
        %v858 = vld [vmem:[#allocation6 + $0x4] sm:$0xf]
        %v861 = vunpack.c.l.b16 %v857
        %v862 = vunpack.c.l.b16 %v858
        %v863 = vpack.c.b16 %v862, %v861
        %v865 = vsel %vm222, %v863, 0
        %867 = vmatpush.bf16.msra.mxu0 0
        %868 = vmatpush.bf16.msra.mxu0 0
        %869 = vmatpush.bf16.msra.mxu0 0
        %870 = vmatpush.bf16.msra.mxu0 0
        %871 = vmatpush.bf16.msra.mxu0 0
        %872 = vmatpush.bf16.msra.mxu0 0
        %873 = vmatpush.bf16.msra.mxu0 0
        %874 = vmatpush.bf16.msra.mxu0 %v855
        %875 = vmatmul.bf16.gmra.mxu0 %v865
        %v876 = vpop.f32.mrf.mxu0
        %v877 = vadd.f32 0.0, %v876
        %v878 = vpop.f32.mrf.mxu0
        %v879 = vadd.f32 0.0, %v878
        %880 = vdwg.mxu0
        %881 = vmatpush.bf16.msra.mxu0 0
        %882 = vmatpush.bf16.msra.mxu0 0
        %883 = vmatpush.bf16.msra.mxu0 0
        %884 = vmatpush.bf16.msra.mxu0 0
        %885 = vmatpush.bf16.msra.mxu0 0
        %886 = vmatpush.bf16.msra.mxu0 0
        %887 = vmatpush.bf16.msra.mxu0 0
        %888 = vmatpush.bf16.msra.mxu0 %v856
        %889 = vmatmul.bf16.gmra.mxu0 %v865
        %v890 = vpop.f32.mrf.mxu0
        %v891 = vadd.f32 0.0, %v890
        %v892 = vpop.f32.mrf.mxu0
        %v893 = vadd.f32 0.0, %v892
        %894 = vdwg.mxu0
        %v895 = vld [vmem:[#allocation8] sm:$0xff]
        %v896 = vld [vmem:[#allocation8 + $0x8] sm:$0xff]
        %v897 = vld [vmem:[#allocation8 + $0x10] sm:$0xff]
        %v898 = vld [vmem:[#allocation8 + $0x18] sm:$0xff]
        %v899 = vld [vmem:[#allocation8 + $0x20] sm:$0xff]
        %v900 = vld [vmem:[#allocation8 + $0x28] sm:$0xff]
        %v901 = vld [vmem:[#allocation8 + $0x30] sm:$0xff]
        %v902 = vld [vmem:[#allocation8 + $0x38] sm:$0xff]
        %v903 = vld [vmem:[#allocation8 + $0x40] sm:$0xff]
        %v904 = vld [vmem:[#allocation8 + $0x48] sm:$0xff]
        %v905 = vld [vmem:[#allocation8 + $0x50] sm:$0xff]
        %v906 = vld [vmem:[#allocation8 + $0x58] sm:$0xff]
        %v907 = vld [vmem:[#allocation8 + $0x60] sm:$0xff]
        %v908 = vld [vmem:[#allocation8 + $0x68] sm:$0xff]
        %v909 = vld [vmem:[#allocation8 + $0x70] sm:$0xff]
        %v910 = vld [vmem:[#allocation8 + $0x78] sm:$0xff]
        %v911 = vld [vmem:[#allocation8 + $0x80] sm:$0xff]
        %v912 = vld [vmem:[#allocation8 + $0x88] sm:$0xff]
        %v913 = vld [vmem:[#allocation8 + $0x90] sm:$0xff]
        %v914 = vld [vmem:[#allocation8 + $0x98] sm:$0xff]
        %v915 = vld [vmem:[#allocation8 + $0xa0] sm:$0xff]
        %v916 = vld [vmem:[#allocation8 + $0xa8] sm:$0xff]
        %v917 = vld [vmem:[#allocation8 + $0xb0] sm:$0xff]
        %v918 = vld [vmem:[#allocation8 + $0xb8] sm:$0xff]
        %v919 = vld [vmem:[#allocation8 + $0xc0] sm:$0xff]
        %v920 = vld [vmem:[#allocation8 + $0xc8] sm:$0xff]
        %v921 = vld [vmem:[#allocation8 + $0xd0] sm:$0xff]
        %v922 = vld [vmem:[#allocation8 + $0xd8] sm:$0xff]
        %v923 = vld [vmem:[#allocation8 + $0xe0] sm:$0xff]
        %v924 = vld [vmem:[#allocation8 + $0xe8] sm:$0xff]
        %v925 = vld [vmem:[#allocation8 + $0xf0] sm:$0xff]
        %v926 = vld [vmem:[#allocation8 + $0xf8] sm:$0xff]
        %v959 = vunpack.c.l.b16 %v895
        %v960 = vunpack.c.h.b16 %v895
        %v961 = vunpack.c.l.b16 %v896
        %v962 = vunpack.c.h.b16 %v896
        %v963 = vunpack.c.l.b16 %v897
        %v964 = vunpack.c.h.b16 %v897
        %v965 = vunpack.c.l.b16 %v898
        %v966 = vunpack.c.h.b16 %v898
        %v967 = vunpack.c.l.b16 %v899
        %v968 = vunpack.c.h.b16 %v899
        %v969 = vunpack.c.l.b16 %v900
        %v970 = vunpack.c.h.b16 %v900
        %v971 = vunpack.c.l.b16 %v901
        %v972 = vunpack.c.h.b16 %v901
        %v973 = vunpack.c.l.b16 %v902
        %v974 = vunpack.c.h.b16 %v902
        %v975 = vunpack.c.l.b16 %v903
        %v976 = vunpack.c.h.b16 %v903
        %v977 = vunpack.c.l.b16 %v904
        %v978 = vunpack.c.h.b16 %v904
        %v979 = vunpack.c.l.b16 %v905
        %v980 = vunpack.c.h.b16 %v905
        %v981 = vunpack.c.l.b16 %v906
        %v982 = vunpack.c.h.b16 %v906
        %v983 = vunpack.c.l.b16 %v907
        %v984 = vunpack.c.h.b16 %v907
        %v985 = vunpack.c.l.b16 %v908
        %v986 = vunpack.c.h.b16 %v908
        %v987 = vunpack.c.l.b16 %v909
        %v988 = vunpack.c.h.b16 %v909
        %v989 = vunpack.c.l.b16 %v910
        %v990 = vunpack.c.h.b16 %v910
        %v991 = vunpack.c.l.b16 %v911
        %v992 = vunpack.c.h.b16 %v911
        %v993 = vunpack.c.l.b16 %v912
        %v994 = vunpack.c.h.b16 %v912
        %v995 = vunpack.c.l.b16 %v913
        %v996 = vunpack.c.h.b16 %v913
        %v997 = vunpack.c.l.b16 %v914
        %v998 = vunpack.c.h.b16 %v914
        %v999 = vunpack.c.l.b16 %v915
        %v1000 = vunpack.c.h.b16 %v915
        %v1001 = vunpack.c.l.b16 %v916
        %v1002 = vunpack.c.h.b16 %v916
        %v1003 = vunpack.c.l.b16 %v917
        %v1004 = vunpack.c.h.b16 %v917
        %v1005 = vunpack.c.l.b16 %v918
        %v1006 = vunpack.c.h.b16 %v918
        %v1007 = vunpack.c.l.b16 %v919
        %v1008 = vunpack.c.h.b16 %v919
        %v1009 = vunpack.c.l.b16 %v920
        %v1010 = vunpack.c.h.b16 %v920
        %v1011 = vunpack.c.l.b16 %v921
        %v1012 = vunpack.c.h.b16 %v921
        %v1013 = vunpack.c.l.b16 %v922
        %v1014 = vunpack.c.h.b16 %v922
        %v1015 = vunpack.c.l.b16 %v923
        %v1016 = vunpack.c.h.b16 %v923
        %v1017 = vunpack.c.l.b16 %v924
        %v1018 = vunpack.c.h.b16 %v924
        %v1019 = vunpack.c.l.b16 %v925
        %v1020 = vunpack.c.h.b16 %v925
        %v1021 = vunpack.c.l.b16 %v926
        %v1022 = vunpack.c.h.b16 %v926
        %v1023 = vpack.c.b16 %v961, %v959
        %v1024 = vpack.c.b16 %v962, %v960
        %v1025 = vpack.c.b16 %v965, %v963
        %v1026 = vpack.c.b16 %v966, %v964
        %v1027 = vpack.c.b16 %v969, %v967
        %v1028 = vpack.c.b16 %v970, %v968
        %v1029 = vpack.c.b16 %v973, %v971
        %v1030 = vpack.c.b16 %v974, %v972
        %v1031 = vpack.c.b16 %v977, %v975
        %v1032 = vpack.c.b16 %v978, %v976
        %v1033 = vpack.c.b16 %v981, %v979
        %v1034 = vpack.c.b16 %v982, %v980
        %v1035 = vpack.c.b16 %v985, %v983
        %v1036 = vpack.c.b16 %v986, %v984
        %v1037 = vpack.c.b16 %v989, %v987
        %v1038 = vpack.c.b16 %v990, %v988
        %v1039 = vpack.c.b16 %v993, %v991
        %v1040 = vpack.c.b16 %v994, %v992
        %v1041 = vpack.c.b16 %v997, %v995
        %v1042 = vpack.c.b16 %v998, %v996
        %v1043 = vpack.c.b16 %v1001, %v999
        %v1044 = vpack.c.b16 %v1002, %v1000
        %v1045 = vpack.c.b16 %v1005, %v1003
        %v1046 = vpack.c.b16 %v1006, %v1004
        %v1047 = vpack.c.b16 %v1009, %v1007
        %v1048 = vpack.c.b16 %v1010, %v1008
        %v1049 = vpack.c.b16 %v1013, %v1011
        %v1050 = vpack.c.b16 %v1014, %v1012
        %v1051 = vpack.c.b16 %v1017, %v1015
        %v1052 = vpack.c.b16 %v1018, %v1016
        %v1053 = vpack.c.b16 %v1021, %v1019
        %v1054 = vpack.c.b16 %v1022, %v1020
        %1087 = vmatpush.bf16.msra.mxu0 %v1037
        %1088 = vmatpush.bf16.msra.mxu0 %v1035
        %1089 = vmatpush.bf16.msra.mxu0 %v1033
        %1090 = vmatpush.bf16.msra.mxu0 %v1031
        %1091 = vmatpush.bf16.msra.mxu0 %v1029
        %1092 = vmatpush.bf16.msra.mxu0 %v1027
        %1093 = vmatpush.bf16.msra.mxu0 %v1025
        %1094 = vmatpush.bf16.msra.mxu0 %v1023
        %1095 = vmatmul.bf16.gmra.mxu0 %v855
        %v1096 = vpop.f32.mrf.mxu0
        %v1097 = vadd.f32 0.0, %v1096
        %v1098 = vpop.f32.mrf.mxu0
        %v1099 = vadd.f32 0.0, %v1098
        %1100 = vdwg.mxu0
        %1101 = vmatpush.bf16.msra.mxu0 %v1053
        %1102 = vmatpush.bf16.msra.mxu0 %v1051
        %1103 = vmatpush.bf16.msra.mxu0 %v1049
        %1104 = vmatpush.bf16.msra.mxu0 %v1047
        %1105 = vmatpush.bf16.msra.mxu0 %v1045
        %1106 = vmatpush.bf16.msra.mxu0 %v1043
        %1107 = vmatpush.bf16.msra.mxu0 %v1041
        %1108 = vmatpush.bf16.msra.mxu0 %v1039
        %1109 = vmatmul.bf16.gmra.mxu0 %v856
        %v1110 = vpop.f32.mrf.mxu0
        %v1111 = vadd.f32 %v1097, %v1110
        %v1112 = vpop.f32.mrf.mxu0
        %v1113 = vadd.f32 %v1099, %v1112
        %1114 = vdwg.mxu0
        %1115 = vmatpush.bf16.msra.mxu0 %v1038
        %1116 = vmatpush.bf16.msra.mxu0 %v1036
        %1117 = vmatpush.bf16.msra.mxu0 %v1034
        %1118 = vmatpush.bf16.msra.mxu0 %v1032
        %1119 = vmatpush.bf16.msra.mxu0 %v1030
        %1120 = vmatpush.bf16.msra.mxu0 %v1028
        %1121 = vmatpush.bf16.msra.mxu0 %v1026
        %1122 = vmatpush.bf16.msra.mxu0 %v1024
        %1123 = vmatmul.bf16.gmra.mxu0 %v855
        %v1124 = vpop.f32.mrf.mxu0
        %v1125 = vadd.f32 0.0, %v1124
        %v1126 = vpop.f32.mrf.mxu0
        %v1127 = vadd.f32 0.0, %v1126
        %1128 = vdwg.mxu0
        %1129 = vmatpush.bf16.msra.mxu0 %v1054
        %1130 = vmatpush.bf16.msra.mxu0 %v1052
        %1131 = vmatpush.bf16.msra.mxu0 %v1050
        %1132 = vmatpush.bf16.msra.mxu0 %v1048
        %1133 = vmatpush.bf16.msra.mxu0 %v1046
        %1134 = vmatpush.bf16.msra.mxu0 %v1044
        %1135 = vmatpush.bf16.msra.mxu0 %v1042
        %1136 = vmatpush.bf16.msra.mxu0 %v1040
        %1137 = vmatmul.bf16.gmra.mxu0 %v856
        %v1138 = vpop.f32.mrf.mxu0
        %v1139 = vadd.f32 %v1125, %v1138
        %v1140 = vpop.f32.mrf.mxu0
        %v1141 = vadd.f32 %v1127, %v1140
        %1142 = vdwg.mxu0
        %v1143 = vld [vmem:[#allocation3] sm:$0xff]
        %v1144 = vld [vmem:[#allocation3 + $0x8] sm:$0xff]
        %v1145 = vld [vmem:[#allocation3 + $0x10] sm:$0xff]
        %v1146 = vld [vmem:[#allocation3 + $0x18] sm:$0xff]
        %v1147 = vadd.f32 %v1143, %v877
        %v1148 = vadd.f32 %v1144, %v891
        %v1149 = vadd.f32 %v1145, %v879
        %v1150 = vadd.f32 %v1146, %v893
        %v1151 = vadd.f32 %v1147, %v1111
        %v1152 = vadd.f32 %v1148, %v1139
        %v1153 = vadd.f32 %v1149, %v1113
        %v1154 = vadd.f32 %v1150, %v1141
        %v1155 = vmul.f32 %v846, 0.8
        %v1156 = vmul.f32 %v847, 0.8
        %v1157 = vmul.f32 %v848, 0.8
        %v1158 = vmul.f32 %v849, 0.8
        %v1159 = vmax.f32 %v1151, 0.0
        %v1160 = vmax.f32 %v1152, 0.0
        %v1161 = vmax.f32 %v1153, 0.0
        %v1162 = vmax.f32 %v1154, 0.0
        %v1163 = vmul.f32 %v1159, 0.2
        %v1164 = vmul.f32 %v1160, 0.2
        %v1165 = vmul.f32 %v1161, 0.2
        %v1166 = vmul.f32 %v1162, 0.2
        %v1167 = vadd.f32 %v1155, %v1163
        %v1168 = vadd.f32 %v1156, %v1164
        %v1169 = vadd.f32 %v1157, %v1165
        %v1170 = vadd.f32 %v1158, %v1166
        %s1171 = scalar_lea.vmem %s198, 32 [#allocation9]
        %1172 = vst [vmem:[%s1171] sm:$0xff] %v1167
        %1173 = vst [vmem:[%s1171 + $0x8] sm:$0xff] %v1168
        %1174 = vst [vmem:[%s1171 + $0x40] sm:$0xff] %v1169
        %1175 = vst [vmem:[%s1171 + $0x48] sm:$0xff] %v1170
        %v1176 = vpack.c.bf16 %v1169, %v1167
        %v1177 = vpack.c.bf16 %v1170, %v1168
        %v1178 = vld [vmem:[#allocation6] sm:$0xf]
        %v1179 = vld [vmem:[#allocation6 + $0x4] sm:$0xf]
        %v1182 = vunpack.c.l.b16 %v1178
        %v1183 = vunpack.c.l.b16 %v1179
        %v1184 = vpack.c.b16 %v1183, %v1182
        %v1186 = vsel %vm222, %v1184, 0
        %1188 = vmatpush.bf16.msra.mxu0 0
        %1189 = vmatpush.bf16.msra.mxu0 0
        %1190 = vmatpush.bf16.msra.mxu0 0
        %1191 = vmatpush.bf16.msra.mxu0 0
        %1192 = vmatpush.bf16.msra.mxu0 0
        %1193 = vmatpush.bf16.msra.mxu0 0
        %1194 = vmatpush.bf16.msra.mxu0 0
        %1195 = vmatpush.bf16.msra.mxu0 %v1176
        %1196 = vmatmul.bf16.gmra.mxu0 %v1186
        %v1197 = vpop.f32.mrf.mxu0
        %v1198 = vadd.f32 0.0, %v1197
        %v1199 = vpop.f32.mrf.mxu0
        %v1200 = vadd.f32 0.0, %v1199
        %1201 = vdwg.mxu0
        %1202 = vmatpush.bf16.msra.mxu0 0
        %1203 = vmatpush.bf16.msra.mxu0 0
        %1204 = vmatpush.bf16.msra.mxu0 0
        %1205 = vmatpush.bf16.msra.mxu0 0
        %1206 = vmatpush.bf16.msra.mxu0 0
        %1207 = vmatpush.bf16.msra.mxu0 0
        %1208 = vmatpush.bf16.msra.mxu0 0
        %1209 = vmatpush.bf16.msra.mxu0 %v1177
        %1210 = vmatmul.bf16.gmra.mxu0 %v1186
        %v1211 = vpop.f32.mrf.mxu0
        %v1212 = vadd.f32 0.0, %v1211
        %v1213 = vpop.f32.mrf.mxu0
        %v1214 = vadd.f32 0.0, %v1213
        %1215 = vdwg.mxu0
        %v1216 = vld [vmem:[#allocation8] sm:$0xff]
        %v1217 = vld [vmem:[#allocation8 + $0x8] sm:$0xff]
        %v1218 = vld [vmem:[#allocation8 + $0x10] sm:$0xff]
        %v1219 = vld [vmem:[#allocation8 + $0x18] sm:$0xff]
        %v1220 = vld [vmem:[#allocation8 + $0x20] sm:$0xff]
        %v1221 = vld [vmem:[#allocation8 + $0x28] sm:$0xff]
        %v1222 = vld [vmem:[#allocation8 + $0x30] sm:$0xff]
        %v1223 = vld [vmem:[#allocation8 + $0x38] sm:$0xff]
        %v1224 = vld [vmem:[#allocation8 + $0x40] sm:$0xff]
        %v1225 = vld [vmem:[#allocation8 + $0x48] sm:$0xff]
        %v1226 = vld [vmem:[#allocation8 + $0x50] sm:$0xff]
        %v1227 = vld [vmem:[#allocation8 + $0x58] sm:$0xff]
        %v1228 = vld [vmem:[#allocation8 + $0x60] sm:$0xff]
        %v1229 = vld [vmem:[#allocation8 + $0x68] sm:$0xff]
        %v1230 = vld [vmem:[#allocation8 + $0x70] sm:$0xff]
        %v1231 = vld [vmem:[#allocation8 + $0x78] sm:$0xff]
        %v1232 = vld [vmem:[#allocation8 + $0x80] sm:$0xff]
        %v1233 = vld [vmem:[#allocation8 + $0x88] sm:$0xff]
        %v1234 = vld [vmem:[#allocation8 + $0x90] sm:$0xff]
        %v1235 = vld [vmem:[#allocation8 + $0x98] sm:$0xff]
        %v1236 = vld [vmem:[#allocation8 + $0xa0] sm:$0xff]
        %v1237 = vld [vmem:[#allocation8 + $0xa8] sm:$0xff]
        %v1238 = vld [vmem:[#allocation8 + $0xb0] sm:$0xff]
        %v1239 = vld [vmem:[#allocation8 + $0xb8] sm:$0xff]
        %v1240 = vld [vmem:[#allocation8 + $0xc0] sm:$0xff]
        %v1241 = vld [vmem:[#allocation8 + $0xc8] sm:$0xff]
        %v1242 = vld [vmem:[#allocation8 + $0xd0] sm:$0xff]
        %v1243 = vld [vmem:[#allocation8 + $0xd8] sm:$0xff]
        %v1244 = vld [vmem:[#allocation8 + $0xe0] sm:$0xff]
        %v1245 = vld [vmem:[#allocation8 + $0xe8] sm:$0xff]
        %v1246 = vld [vmem:[#allocation8 + $0xf0] sm:$0xff]
        %v1247 = vld [vmem:[#allocation8 + $0xf8] sm:$0xff]
        %v1280 = vunpack.c.l.b16 %v1216
        %v1281 = vunpack.c.h.b16 %v1216
        %v1282 = vunpack.c.l.b16 %v1217
        %v1283 = vunpack.c.h.b16 %v1217
        %v1284 = vunpack.c.l.b16 %v1218
        %v1285 = vunpack.c.h.b16 %v1218
        %v1286 = vunpack.c.l.b16 %v1219
        %v1287 = vunpack.c.h.b16 %v1219
        %v1288 = vunpack.c.l.b16 %v1220
        %v1289 = vunpack.c.h.b16 %v1220
        %v1290 = vunpack.c.l.b16 %v1221
        %v1291 = vunpack.c.h.b16 %v1221
        %v1292 = vunpack.c.l.b16 %v1222
        %v1293 = vunpack.c.h.b16 %v1222
        %v1294 = vunpack.c.l.b16 %v1223
        %v1295 = vunpack.c.h.b16 %v1223
        %v1296 = vunpack.c.l.b16 %v1224
        %v1297 = vunpack.c.h.b16 %v1224
        %v1298 = vunpack.c.l.b16 %v1225
        %v1299 = vunpack.c.h.b16 %v1225
        %v1300 = vunpack.c.l.b16 %v1226
        %v1301 = vunpack.c.h.b16 %v1226
        %v1302 = vunpack.c.l.b16 %v1227
        %v1303 = vunpack.c.h.b16 %v1227
        %v1304 = vunpack.c.l.b16 %v1228
        %v1305 = vunpack.c.h.b16 %v1228
        %v1306 = vunpack.c.l.b16 %v1229
        %v1307 = vunpack.c.h.b16 %v1229
        %v1308 = vunpack.c.l.b16 %v1230
        %v1309 = vunpack.c.h.b16 %v1230
        %v1310 = vunpack.c.l.b16 %v1231
        %v1311 = vunpack.c.h.b16 %v1231
        %v1312 = vunpack.c.l.b16 %v1232
        %v1313 = vunpack.c.h.b16 %v1232
        %v1314 = vunpack.c.l.b16 %v1233
        %v1315 = vunpack.c.h.b16 %v1233
        %v1316 = vunpack.c.l.b16 %v1234
        %v1317 = vunpack.c.h.b16 %v1234
        %v1318 = vunpack.c.l.b16 %v1235
        %v1319 = vunpack.c.h.b16 %v1235
        %v1320 = vunpack.c.l.b16 %v1236
        %v1321 = vunpack.c.h.b16 %v1236
        %v1322 = vunpack.c.l.b16 %v1237
        %v1323 = vunpack.c.h.b16 %v1237
        %v1324 = vunpack.c.l.b16 %v1238
        %v1325 = vunpack.c.h.b16 %v1238
        %v1326 = vunpack.c.l.b16 %v1239
        %v1327 = vunpack.c.h.b16 %v1239
        %v1328 = vunpack.c.l.b16 %v1240
        %v1329 = vunpack.c.h.b16 %v1240
        %v1330 = vunpack.c.l.b16 %v1241
        %v1331 = vunpack.c.h.b16 %v1241
        %v1332 = vunpack.c.l.b16 %v1242
        %v1333 = vunpack.c.h.b16 %v1242
        %v1334 = vunpack.c.l.b16 %v1243
        %v1335 = vunpack.c.h.b16 %v1243
        %v1336 = vunpack.c.l.b16 %v1244
        %v1337 = vunpack.c.h.b16 %v1244
        %v1338 = vunpack.c.l.b16 %v1245
        %v1339 = vunpack.c.h.b16 %v1245
        %v1340 = vunpack.c.l.b16 %v1246
        %v1341 = vunpack.c.h.b16 %v1246
        %v1342 = vunpack.c.l.b16 %v1247
        %v1343 = vunpack.c.h.b16 %v1247
        %v1344 = vpack.c.b16 %v1282, %v1280
        %v1345 = vpack.c.b16 %v1283, %v1281
        %v1346 = vpack.c.b16 %v1286, %v1284
        %v1347 = vpack.c.b16 %v1287, %v1285
        %v1348 = vpack.c.b16 %v1290, %v1288
        %v1349 = vpack.c.b16 %v1291, %v1289
        %v1350 = vpack.c.b16 %v1294, %v1292
        %v1351 = vpack.c.b16 %v1295, %v1293
        %v1352 = vpack.c.b16 %v1298, %v1296
        %v1353 = vpack.c.b16 %v1299, %v1297
        %v1354 = vpack.c.b16 %v1302, %v1300
        %v1355 = vpack.c.b16 %v1303, %v1301
        %v1356 = vpack.c.b16 %v1306, %v1304
        %v1357 = vpack.c.b16 %v1307, %v1305
        %v1358 = vpack.c.b16 %v1310, %v1308
        %v1359 = vpack.c.b16 %v1311, %v1309
        %v1360 = vpack.c.b16 %v1314, %v1312
        %v1361 = vpack.c.b16 %v1315, %v1313
        %v1362 = vpack.c.b16 %v1318, %v1316
        %v1363 = vpack.c.b16 %v1319, %v1317
        %v1364 = vpack.c.b16 %v1322, %v1320
        %v1365 = vpack.c.b16 %v1323, %v1321
        %v1366 = vpack.c.b16 %v1326, %v1324
        %v1367 = vpack.c.b16 %v1327, %v1325
        %v1368 = vpack.c.b16 %v1330, %v1328
        %v1369 = vpack.c.b16 %v1331, %v1329
        %v1370 = vpack.c.b16 %v1334, %v1332
        %v1371 = vpack.c.b16 %v1335, %v1333
        %v1372 = vpack.c.b16 %v1338, %v1336
        %v1373 = vpack.c.b16 %v1339, %v1337
        %v1374 = vpack.c.b16 %v1342, %v1340
        %v1375 = vpack.c.b16 %v1343, %v1341
        %1408 = vmatpush.bf16.msra.mxu0 %v1358
        %1409 = vmatpush.bf16.msra.mxu0 %v1356
        %1410 = vmatpush.bf16.msra.mxu0 %v1354
        %1411 = vmatpush.bf16.msra.mxu0 %v1352
        %1412 = vmatpush.bf16.msra.mxu0 %v1350
        %1413 = vmatpush.bf16.msra.mxu0 %v1348
        %1414 = vmatpush.bf16.msra.mxu0 %v1346
        %1415 = vmatpush.bf16.msra.mxu0 %v1344
        %1416 = vmatmul.bf16.gmra.mxu0 %v1176
        %v1417 = vpop.f32.mrf.mxu0
        %v1418 = vadd.f32 0.0, %v1417
        %v1419 = vpop.f32.mrf.mxu0
        %v1420 = vadd.f32 0.0, %v1419
        %1421 = vdwg.mxu0
        %1422 = vmatpush.bf16.msra.mxu0 %v1374
        %1423 = vmatpush.bf16.msra.mxu0 %v1372
        %1424 = vmatpush.bf16.msra.mxu0 %v1370
        %1425 = vmatpush.bf16.msra.mxu0 %v1368
        %1426 = vmatpush.bf16.msra.mxu0 %v1366
        %1427 = vmatpush.bf16.msra.mxu0 %v1364
        %1428 = vmatpush.bf16.msra.mxu0 %v1362
        %1429 = vmatpush.bf16.msra.mxu0 %v1360
        %1430 = vmatmul.bf16.gmra.mxu0 %v1177
        %v1431 = vpop.f32.mrf.mxu0
        %v1432 = vadd.f32 %v1418, %v1431
        %v1433 = vpop.f32.mrf.mxu0
        %v1434 = vadd.f32 %v1420, %v1433
        %1435 = vdwg.mxu0
        %1436 = vmatpush.bf16.msra.mxu0 %v1359
        %1437 = vmatpush.bf16.msra.mxu0 %v1357
        %1438 = vmatpush.bf16.msra.mxu0 %v1355
        %1439 = vmatpush.bf16.msra.mxu0 %v1353
        %1440 = vmatpush.bf16.msra.mxu0 %v1351
        %1441 = vmatpush.bf16.msra.mxu0 %v1349
        %1442 = vmatpush.bf16.msra.mxu0 %v1347
        %1443 = vmatpush.bf16.msra.mxu0 %v1345
        %1444 = vmatmul.bf16.gmra.mxu0 %v1176
        %v1445 = vpop.f32.mrf.mxu0
        %v1446 = vadd.f32 0.0, %v1445
        %v1447 = vpop.f32.mrf.mxu0
        %v1448 = vadd.f32 0.0, %v1447
        %1449 = vdwg.mxu0
        %1450 = vmatpush.bf16.msra.mxu0 %v1375
        %1451 = vmatpush.bf16.msra.mxu0 %v1373
        %1452 = vmatpush.bf16.msra.mxu0 %v1371
        %1453 = vmatpush.bf16.msra.mxu0 %v1369
        %1454 = vmatpush.bf16.msra.mxu0 %v1367
        %1455 = vmatpush.bf16.msra.mxu0 %v1365
        %1456 = vmatpush.bf16.msra.mxu0 %v1363
        %1457 = vmatpush.bf16.msra.mxu0 %v1361
        %1458 = vmatmul.bf16.gmra.mxu0 %v1177
        %v1459 = vpop.f32.mrf.mxu0
        %v1460 = vadd.f32 %v1446, %v1459
        %v1461 = vpop.f32.mrf.mxu0
        %v1462 = vadd.f32 %v1448, %v1461
        %1463 = vdwg.mxu0
        %v1464 = vld [vmem:[#allocation3] sm:$0xff]
        %v1465 = vld [vmem:[#allocation3 + $0x8] sm:$0xff]
        %v1466 = vld [vmem:[#allocation3 + $0x10] sm:$0xff]
        %v1467 = vld [vmem:[#allocation3 + $0x18] sm:$0xff]
        %v1468 = vadd.f32 %v1464, %v1198
        %v1469 = vadd.f32 %v1465, %v1212
        %v1470 = vadd.f32 %v1466, %v1200
        %v1471 = vadd.f32 %v1467, %v1214
        %v1472 = vadd.f32 %v1468, %v1432
        %v1473 = vadd.f32 %v1469, %v1460
        %v1474 = vadd.f32 %v1470, %v1434
        %v1475 = vadd.f32 %v1471, %v1462
        %v1476 = vmul.f32 %v1167, 0.8
        %v1477 = vmul.f32 %v1168, 0.8
        %v1478 = vmul.f32 %v1169, 0.8
        %v1479 = vmul.f32 %v1170, 0.8
        %v1480 = vmax.f32 %v1472, 0.0
        %v1481 = vmax.f32 %v1473, 0.0
        %v1482 = vmax.f32 %v1474, 0.0
        %v1483 = vmax.f32 %v1475, 0.0
        %v1484 = vmul.f32 %v1480, 0.2
        %v1485 = vmul.f32 %v1481, 0.2
        %v1486 = vmul.f32 %v1482, 0.2
        %v1487 = vmul.f32 %v1483, 0.2
        %v1488 = vadd.f32 %v1476, %v1484
        %v1489 = vadd.f32 %v1477, %v1485
        %v1490 = vadd.f32 %v1478, %v1486
        %v1491 = vadd.f32 %v1479, %v1487
        %s1492 = scalar_lea.vmem %s198, 48 [#allocation9]
        %1493 = vst [vmem:[%s1492] sm:$0xff] %v1488
        %1494 = vst [vmem:[%s1492 + $0x8] sm:$0xff] %v1489
        %1495 = vst [vmem:[%s1492 + $0x40] sm:$0xff] %v1490
        %1496 = vst [vmem:[%s1492 + $0x48] sm:$0xff] %v1491
        %1497 = vst [vmem:[#allocation2] sm:$0xff] %v1488
        %1498 = vst [vmem:[#allocation2 + $0x8] sm:$0xff] %v1489
        %1499 = vst [vmem:[#allocation2 + $0x10] sm:$0xff] %v1490
        %1500 = vst [vmem:[#allocation2 + $0x18] sm:$0xff] %v1491
        %s1501 = sand.u32 %s90, 1
        %s1502 = scalar_lea.sflag [#allocation5], %s1501
        %s1503 = sand.u32 %s90, 1
        %s1504 = smul.addr %s1503, 128
        %s1505 = scalar_lea.vmem [#allocation9], %s1504
        // Predicated region
        $region49: #{tpu_custom_call.1} parent=31 // pred_check
          %p1506 = pneg %p100
        $region50: #{tpu_custom_call.1} parent=31 // pred_check_branch
          %1508 = sbr.rel (%p1506) target = $region52
        $region51: #{tpu_custom_call.1} parent=31 // pred_region
          #allocation11 [shape = 'u32[6]{0}', space=smem, size = 0x18, scoped, tag = 'DMA stride descriptor']
          %s1509 = smul.u32 4, %s19
          %1511 = vsyncadd %s1502, 0
          %s1512 = smul.addr %s1509, 2
          %s1513 = smul.addr %s1512, 8
          %s1514 = scalar_lea.hbm %s3, %s1513
          %s1516 = sshll.u32 1, 14
          %s1517 = sxor.u32 4294967295, %s1516
          %s1520 = sshll.u32 7, 18
          %s1521 = sxor.u32 4294967295, %s1520
          %s1522 = sand.u32 0, %s1521
          %s1524 = sor.u32 %s1522, 0
          %s1525 = sshll.u32 %s1505, 4
          %s1526 = int_to_ptr.vmem [resolvable:$true] %s1525
          %s1527 = sshll.u32 %s1514, 4
          %s1528 = int_to_ptr.hbm [resolvable:$true] %s1527
          %1534 = sst [smem:[#allocation11]] 1024
          %s1535 = scalar_lea.smem [#allocation11], 1
          %1536 = sst [smem:[%s1535]] 2048
          %s1537 = scalar_lea.smem [#allocation11], 2
          %1538 = sst [smem:[%s1537]] 4
          %s1539 = scalar_lea.smem [#allocation11], 3
          %1540 = sst [smem:[%s1539]] 256
          %s1541 = scalar_lea.smem [#allocation11], 4
          %1542 = sst [smem:[%s1541]] 256
          %s1543 = scalar_lea.smem [#allocation11], 5
          %1544 = sst [smem:[%s1543]] 16
          %1546 = dma.general %s1526, 2048, %s1528, %s1502, [#allocation10], [#allocation11], %s1524, 0
        $region52: #{tpu_custom_call.1} parent=31 // pred_fallthru
          _
      $region32: #{tpu_custom_call.1} parent=5 // pred_fallthru
        _
      %p1547 = scmp.le.s32.totalorder 2, %s14
      // Predicated region
      $region53: #{tpu_custom_call.1} parent=5 // pred_check
        %p1548 = pneg %p1547
      $region54: #{tpu_custom_call.1} parent=5 // pred_check_branch
        %1550 = sbr.rel (%p1548) target = $region56
      $region55: #{tpu_custom_call.1} parent=5 // pred_region
        %s1551 = ssub.s32 %s14, 2
        // Predicated region
        $region57: #{tpu_custom_call.1} parent=55 // pred_check
          %p1552 = pneg %p106
        $region58: #{tpu_custom_call.1} parent=55 // pred_check_branch
          %1554 = sbr.rel (%p1552) target = $region60
        $region59: #{tpu_custom_call.1} parent=55 // pred_region
          %s1555 = sand.u32 %s91, 1
          %s1556 = scalar_lea.sflag [#allocation5], %s1555
          %s1557 = sand.u32 %s91, 1
          %s1558 = smul.addr %s1557, 128
          %s1559 = scalar_lea.vmem [#allocation9], %s1558
          %1561 = dma.done %s1556, 2048
        $region60: #{tpu_custom_call.1} parent=55 // pred_fallthru
          _
      $region56: #{tpu_custom_call.1} parent=5 // pred_fallthru
        _
    $region6: #{tpu_custom_call.1} parent=1 // loop_footer
      %s18 = sadd.s32 1, %s14
    $region7: #{tpu_custom_call.1} parent=1 // loop_footer_branch
      %13 = sbr.rel target = $region3
    $region8: #{tpu_custom_call.1} parent=1 // loop_exit
      _
    %1562 = vsyncpa [#allocation4], 1
    %s1563 = scalar_lea.sflag [#allocation4], 1
    %1564 = vsyncpa %s1563, 1
    %1565 = vsyncpa [#allocation7], 1
    %1566 = vsyncpa [#allocation5], 1
    %s1567 = scalar_lea.sflag [#allocation5], 1
    %1568 = vsyncpa %s1567, 1

</llo_original>
